<compile_context>
chip_gen: v7x
topology: tpu7x:2x2x1
jax: 0.10.0
libtpu: 0.0.40
codegen_flags: <defaults>
</compile_context>

<pallas_src>
import jax
import jax.numpy as jnp
from jax.experimental import pallas as pl
from jax.experimental.pallas import tpu as pltpu

LN_EPS = 1e-3  # matches LayerNormalization(d_hid, eps=0.001)


def _ffn_kernel(x_ref, w1_ref, b1_ref, w2_ref, b2_ref, g_ref, beta_ref,
                o_ref, acc_ref):
    k = pl.program_id(1)

    @pl.when(k == 0)
    def _init():
        acc_ref[...] = jnp.zeros_like(acc_ref)

    x = x_ref[...]                                  # (tm, d_hid) f32 (residual / LN path)
    x_bf = x.astype(jnp.bfloat16)                   # single cast feeding the MXU

    # w_1 chunk: project up + ReLU.
    # TODO(synk): FeatureDropout (relu_dropout) is train-only per-batch-element feature
    # masking; in eval mode it is an exact identity, which is what is implemented here.
    h = jnp.dot(x_bf, w1_ref[...], preferred_element_type=jnp.float32) + b1_ref[...]
    h = jnp.maximum(h, 0.0)

    # w_2 chunk: partial contraction over this d_ff block, accumulate in f32 VMEM.
    acc_ref[...] += jnp.dot(h.astype(jnp.bfloat16), w2_ref[...],
                            preferred_element_type=jnp.float32)

    @pl.when(k == pl.num_programs(1) - 1)
    def _finalize():
        # residual add (residual_dropout identity in eval mode) + LayerNorm, all f32.
        z = acc_ref[...] + b2_ref[...] + x          # (tm, d_hid)
        d = z.shape[-1]
        mu = jnp.mean(z, axis=-1, keepdims=True)
        diff = z - mu
        var_unbiased = jnp.sum(diff * diff, axis=-1, keepdims=True) / (d - 1)
        sigma = jnp.sqrt(var_unbiased)
        # torch denominator is (sigma + eps), NOT sqrt(var + eps).
        ln = diff * pl.reciprocal(sigma + LN_EPS, approx=True)
        o_ref[...] = (ln * g_ref[...] + beta_ref[...]).astype(o_ref.dtype)


def positionwise_feed_forward(x, w1, b1, w2, b2, ln_a, ln_b, *, tm=256, tk_ff=256):
    """x: (N, d_hid) f32. w1: (d_ff, d_hid) torch layout, w2: (d_hid, d_ff)."""
    N, d_hid = x.shape
    d_ff = w1.shape[0]
    # NOTE: for lane-dense stores d_hid should be a multiple of 128 (true for real
    # transformer dims); blocks spanning the full feature dim are still legal otherwise.

    # Token tile: as large as requested but no taller than the (8-aligned) token count.
    tm_eff = min(tm, pl.cdiv(N, 8) * 8)
    n_pad = pl.cdiv(N, tm_eff) * tm_eff
    x_in = x if n_pad == N else jnp.pad(x, ((0, n_pad - N), (0, 0)))

    # d_ff contraction tile (streamed with an accumulator); fall back to full d_ff.
    tk_eff = tk_ff if (d_ff % tk_ff == 0 and tk_ff % 128 == 0) else d_ff

    # bf16 weights (halves VMEM weight footprint, feeds the bf16 MXU); biases/LN in f32.
    w1_t = w1.T.astype(jnp.bfloat16)                 # (d_hid, d_ff)
    w2_t = w2.T.astype(jnp.bfloat16)                 # (d_ff, d_hid)
    b1_r = b1.reshape(1, d_ff).astype(jnp.float32)
    b2_r = b2.reshape(1, d_hid).astype(jnp.float32)
    g_r = ln_a.reshape(1, d_hid).astype(jnp.float32)
    beta_r = ln_b.reshape(1, d_hid).astype(jnp.float32)

    # Explicit VMEM budget (double-buffered ins/outs + f32 accumulator) with headroom.
    vmem_bytes = (
        2 * tm_eff * d_hid * 4          # x tiles
        + 2 * d_hid * tk_eff * 2        # W1^T tiles (bf16)
        + 2 * tk_eff * d_hid * 2        # W2^T tiles (bf16)
        + 2 * tk_eff * 4 + 6 * d_hid * 4  # biases + LN params
        + 2 * tm_eff * d_hid * 4        # output tiles
        + tm_eff * d_hid * 4            # accumulator scratch
    )
    vmem_limit = int(min(max(2 * vmem_bytes + (4 << 20), 16 << 20), 64 << 20))

    grid = (n_pad // tm_eff, d_ff // tk_eff)
    out = pl.pallas_call(
        _ffn_kernel,
        out_shape=jax.ShapeDtypeStruct((n_pad, d_hid), x.dtype),
        grid_spec=pltpu.PrefetchScalarGridSpec(
            num_scalar_prefetch=0,
            grid=grid,
            in_specs=[
                pl.BlockSpec((tm_eff, d_hid), lambda i, k: (i, 0)),   # x tile (resident over k)
                pl.BlockSpec((d_hid, tk_eff), lambda i, k: (0, k)),   # W1^T chunk
                pl.BlockSpec((1, tk_eff), lambda i, k: (0, k)),       # b1 chunk
                pl.BlockSpec((tk_eff, d_hid), lambda i, k: (k, 0)),   # W2^T chunk
                pl.BlockSpec((1, d_hid), lambda i, k: (0, 0)),        # b2
                pl.BlockSpec((1, d_hid), lambda i, k: (0, 0)),        # ln gain a_2
                pl.BlockSpec((1, d_hid), lambda i, k: (0, 0)),        # ln bias b_2
            ],
            out_specs=pl.BlockSpec((tm_eff, d_hid), lambda i, k: (i, 0)),
            scratch_shapes=[pltpu.VMEM((tm_eff, d_hid), jnp.float32)],
        ),
        compiler_params=pltpu.CompilerParams(
            dimension_semantics=("parallel", "arbitrary"),
            vmem_limit_bytes=vmem_limit,
        ),
    )(x_in, w1_t, b1_r, w2_t, b2_r, g_r, beta_r)

    return out if n_pad == N else out[:N]


def _reference(x, w1, b1, w2, b2, ln_a, ln_b):
    """Mirrors the kernel's bf16-operand / f32-accumulate matmuls; LN in f32."""
    h = jnp.dot(x.astype(jnp.bfloat16), w1.T.astype(jnp.bfloat16),
                preferred_element_type=jnp.float32) + b1
    h = jnp.maximum(h, 0.0)
    y = jnp.dot(h.astype(jnp.bfloat16), w2.T.astype(jnp.bfloat16),
                preferred_element_type=jnp.float32) + b2
    z = y + x
    mu = jnp.mean(z, axis=-1, keepdims=True)
    sigma = jnp.sqrt(jnp.sum((z - mu) ** 2, axis=-1, keepdims=True) / (z.shape[-1] - 1))
    ln = (z - mu) / (sigma + LN_EPS)
    return ln * ln_a + ln_b


if __name__ == "__main__":
    # Small but MXU/lane-friendly shapes: 512 tokens, d_hid=128 (lane-dense), d_ff=512.
    # With tm=256 the token grid has 2 parallel steps (both TCs busy on v7x); the d_ff
    # axis is streamed in 2 chunks of 256.
    N, d_hid, d_ff = 512, 128, 512

    key = jax.random.PRNGKey(0)
    kx, k1, kb1, k2, kb2 = jax.random.split(key, 5)

    x = jax.random.normal(kx, (N, d_hid), dtype=jnp.float32)
    # nn.Linear(d_hid, d_ff): weight (d_ff, d_hid), bias (d_ff,)
    w1 = jax.random.normal(k1, (d_ff, d_hid), dtype=jnp.float32) * 0.1
    b1 = jax.random.normal(kb1, (d_ff,), dtype=jnp.float32) * 0.1
    # nn.Linear(d_ff, d_hid): weight (d_hid, d_ff), bias (d_hid,)
    w2 = jax.random.normal(k2, (d_hid, d_ff), dtype=jnp.float32) * 0.1
    b2 = jax.random.normal(kb2, (d_hid,), dtype=jnp.float32) * 0.1
    # LayerNormalization affine params: ones / zeros as in __init__
    ln_a = jnp.ones((d_hid,), dtype=jnp.float32)
    ln_b = jnp.zeros((d_hid,), dtype=jnp.float32)

    out = positionwise_feed_forward(x, w1, b1, w2, b2, ln_a, ln_b, tm=256, tk_ff=256)
    out = jax.block_until_ready(out)

    ref = _reference(x, w1, b1, w2, b2, ln_a, ln_b)
    assert out.shape == (N, d_hid)
    assert jnp.allclose(out, ref, atol=5e-3, rtol=5e-3), (
        float(jnp.max(jnp.abs(out - ref))))

    print("KERNEL_OK")
</pallas_src>

<mosaic_0001>
module attributes {stable_mosaic.version = 11 : i64} {
  func.func @_ffn_kernel(%arg0: i32, %arg1: i32, %arg2: memref<256x128xf32, #tpu.memory_space<vmem>>, %arg3: memref<128x256xbf16, #tpu.memory_space<vmem>>, %arg4: memref<1x256xf32, #tpu.memory_space<vmem>>, %arg5: memref<256x128xbf16, #tpu.memory_space<vmem>>, %arg6: memref<1x128xf32, #tpu.memory_space<vmem>>, %arg7: memref<1x128xf32, #tpu.memory_space<vmem>>, %arg8: memref<1x128xf32, #tpu.memory_space<vmem>>, %arg9: memref<256x128xf32, #tpu.memory_space<vmem>>, %arg10: memref<256x128xf32, #tpu.memory_space<vmem>>) attributes {dimension_semantics = [#tpu.dimension_semantics<parallel>, #tpu.dimension_semantics<arbitrary>], iteration_bounds = array<i64: 2, 2>, scalar_prefetch = 0 : i64, scratch_operands = 1 : i64, tpu.core_type = #tpu.core_type<tc>, window_params = [{transform_indices = @transform_0, window_bounds = array<i64: 256, 128>}, {transform_indices = @transform_1, window_bounds = array<i64: 128, 256>}, {transform_indices = @transform_2, window_bounds = array<i64: 1, 256>}, {transform_indices = @transform_3, window_bounds = array<i64: 256, 128>}, {pipeline_mode = #tpu.pipeline_mode<synchronous>, transform_indices = @transform_4, window_bounds = array<i64: 1, 128>}, {pipeline_mode = #tpu.pipeline_mode<synchronous>, transform_indices = @transform_5, window_bounds = array<i64: 1, 128>}, {pipeline_mode = #tpu.pipeline_mode<synchronous>, transform_indices = @transform_6, window_bounds = array<i64: 1, 128>}, {transform_indices = @transform_7, window_bounds = array<i64: 256, 128>}]} {
    %c0_i32 = arith.constant 0 : i32
    %0 = arith.cmpi eq, %arg1, %c0_i32 : i32
    %1 = arith.extui %0 : i1 to i32
    %c0_i32_0 = arith.constant 0 : i32
    %2 = arith.cmpi ne, %1, %c0_i32_0 : i32
    scf.if %2 {
      %cst_15 = arith.constant 0.000000e+00 : f32
      %21 = vector.broadcast %cst_15 : f32 to vector<256x128xf32>
      %c0_16 = arith.constant 0 : index
      %c0_17 = arith.constant 0 : index
      %22 = vector.load %arg10[%c0_16, %c0_17] : memref<256x128xf32, #tpu.memory_space<vmem>>, vector<256x128xf32>
      tpu.vector_store %arg10[%c0_16, %c0_17], %21 {strides = array<i32>} : memref<256x128xf32, #tpu.memory_space<vmem>>, vector<256x128xf32>,
    } else {
    }
    %c0 = arith.constant 0 : index
    %c0_1 = arith.constant 0 : index
    %3 = vector.load %arg2[%c0, %c0_1] : memref<256x128xf32, #tpu.memory_space<vmem>>, vector<256x128xf32>
    %4 = arith.truncf %3 : vector<256x128xf32> to vector<256x128xbf16>
    %c0_2 = arith.constant 0 : index
    %c0_3 = arith.constant 0 : index
    %5 = vector.load %arg3[%c0_2, %c0_3] : memref<128x256xbf16, #tpu.memory_space<vmem>>, vector<128x256xbf16>
    %cst = arith.constant dense<0.000000e+00> : vector<256x256xf32>
    %6 = tpu.matmul %4, %5, %cst {dimension_numbers = #tpu.dot_dimension_numbers<[1], [0], [0], [1], [0, 0, 1, 1], [], []>} : vector<256x128xbf16>, vector<128x256xbf16>, vector<256x256xf32> -> vector<256x256xf32>
    %c0_4 = arith.constant 0 : index
    %c0_5 = arith.constant 0 : index
    %7 = vector.load %arg4[%c0_4, %c0_5] : memref<1x256xf32, #tpu.memory_space<vmem>>, vector<1x256xf32>
    %8 = vector.broadcast %7 : vector<1x256xf32> to vector<256x256xf32>
    %9 = arith.addf %6, %8 : vector<256x256xf32>
    %cst_6 = arith.constant 0.000000e+00 : f32
    %10 = vector.broadcast %cst_6 : f32 to vector<256x256xf32>
    %11 = arith.maximumf %9, %10 : vector<256x256xf32>
    %c0_7 = arith.constant 0 : index
    %c0_8 = arith.constant 0 : index
    %12 = vector.load %arg10[%c0_7, %c0_8] : memref<256x128xf32, #tpu.memory_space<vmem>>, vector<256x128xf32>
    %13 = arith.truncf %11 : vector<256x256xf32> to vector<256x256xbf16>
    %c0_9 = arith.constant 0 : index
    %c0_10 = arith.constant 0 : index
    %14 = vector.load %arg5[%c0_9, %c0_10] : memref<256x128xbf16, #tpu.memory_space<vmem>>, vector<256x128xbf16>
    %cst_11 = arith.constant dense<0.000000e+00> : vector<256x128xf32>
    %15 = tpu.matmul %13, %14, %cst_11 {dimension_numbers = #tpu.dot_dimension_numbers<[1], [0], [0], [1], [0, 0, 1, 1], [], []>} : vector<256x256xbf16>, vector<256x128xbf16>, vector<256x128xf32> -> vector<256x128xf32>
    %16 = arith.addf %12, %15 : vector<256x128xf32>
    %c0_12 = arith.constant 0 : index
    %c0_13 = arith.constant 0 : index
    %17 = vector.load %arg10[%c0_12, %c0_13] : memref<256x128xf32, #tpu.memory_space<vmem>>, vector<256x128xf32>
    tpu.vector_store %arg10[%c0_12, %c0_13], %16 {strides = array<i32>} : memref<256x128xf32, #tpu.memory_space<vmem>>, vector<256x128xf32>,
    %c1_i32 = arith.constant 1 : i32
    %18 = arith.cmpi eq, %arg1, %c1_i32 : i32
    %19 = arith.extui %18 : i1 to i32
    %c0_i32_14 = arith.constant 0 : i32
    %20 = arith.cmpi ne, %19, %c0_i32_14 : i32
    scf.if %20 {
      %c0_15 = arith.constant 0 : index
      %c0_16 = arith.constant 0 : index
      %21 = vector.load %arg10[%c0_15, %c0_16] : memref<256x128xf32, #tpu.memory_space<vmem>>, vector<256x128xf32>
      %c0_17 = arith.constant 0 : index
      %c0_18 = arith.constant 0 : index
      %22 = vector.load %arg6[%c0_17, %c0_18] : memref<1x128xf32, #tpu.memory_space<vmem>>, vector<1x128xf32>
      %23 = vector.broadcast %22 : vector<1x128xf32> to vector<256x128xf32>
      %24 = arith.addf %21, %23 : vector<256x128xf32>
      %25 = arith.addf %24, %3 : vector<256x128xf32>
      %cst_19 = arith.constant dense<0.000000e+00> : vector<256xf32>
      %26 = vector.multi_reduction <add>, %25, %cst_19 [1] : vector<256x128xf32> to vector<256xf32>
      %27 = vector.shape_cast %26 : vector<256xf32> to vector<256x1xf32>
      %cst_20 = arith.constant 1.280000e+02 : f32
      %28 = vector.broadcast %cst_20 : f32 to vector<256x1xf32>
      %29 = arith.divf %27, %28 : vector<256x1xf32>
      %30 = vector.broadcast %29 : vector<256x1xf32> to vector<256x128xf32>
      %31 = arith.subf %25, %30 : vector<256x128xf32>
      %32 = arith.mulf %31, %31 : vector<256x128xf32>
      %cst_21 = arith.constant dense<0.000000e+00> : vector<256xf32>
      %33 = vector.multi_reduction <add>, %32, %cst_21 [1] : vector<256x128xf32> to vector<256xf32>
      %34 = vector.shape_cast %33 : vector<256xf32> to vector<256x1xf32>
      %cst_22 = arith.constant 1.270000e+02 : f32
      %35 = vector.broadcast %cst_22 : f32 to vector<256x1xf32>
      %36 = arith.divf %34, %35 : vector<256x1xf32>
      %37 = math.sqrt %36 : vector<256x1xf32>
      %cst_23 = arith.constant 1.000000e-03 : f32
      %38 = vector.broadcast %cst_23 : f32 to vector<256x1xf32>
      %39 = arith.addf %37, %38 : vector<256x1xf32>
      %40 = tpu.reciprocal %39 {approx = true} : vector<256x1xf32> -> vector<256x1xf32>
      %41 = vector.broadcast %40 : vector<256x1xf32> to vector<256x128xf32>
      %42 = arith.mulf %31, %41 : vector<256x128xf32>
      %c0_24 = arith.constant 0 : index
      %c0_25 = arith.constant 0 : index
      %43 = vector.load %arg7[%c0_24, %c0_25] : memref<1x128xf32, #tpu.memory_space<vmem>>, vector<1x128xf32>
      %44 = vector.broadcast %43 : vector<1x128xf32> to vector<256x128xf32>
      %45 = arith.mulf %42, %44 : vector<256x128xf32>
      %c0_26 = arith.constant 0 : index
      %c0_27 = arith.constant 0 : index
      %46 = vector.load %arg8[%c0_26, %c0_27] : memref<1x128xf32, #tpu.memory_space<vmem>>, vector<1x128xf32>
      %47 = vector.broadcast %46 : vector<1x128xf32> to vector<256x128xf32>
      %48 = arith.addf %45, %47 : vector<256x128xf32>
      %c0_28 = arith.constant 0 : index
      %c0_29 = arith.constant 0 : index
      %49 = vector.load %arg9[%c0_28, %c0_29] : memref<256x128xf32, #tpu.memory_space<vmem>>, vector<256x128xf32>
      tpu.vector_store %arg9[%c0_28, %c0_29], %48 {strides = array<i32>} : memref<256x128xf32, #tpu.memory_space<vmem>>, vector<256x128xf32>,
    } else {
    }
    return
  }
  func.func @transform_0(%arg0: i32, %arg1: i32) -> (i32, i32) {
    %c0_i32 = arith.constant 0 : i32
    %c0_i32_0 = arith.constant 0 : i32
    return %arg0, %c0_i32 : i32, i32
  }
  func.func @transform_1(%arg0: i32, %arg1: i32) -> (i32, i32) {
    %c0_i32 = arith.constant 0 : i32
    %c0_i32_0 = arith.constant 0 : i32
    return %c0_i32, %arg1 : i32, i32
  }
  func.func @transform_2(%arg0: i32, %arg1: i32) -> (i32, i32) {
    %c0_i32 = arith.constant 0 : i32
    %c0_i32_0 = arith.constant 0 : i32
    return %c0_i32, %arg1 : i32, i32
  }
  func.func @transform_3(%arg0: i32, %arg1: i32) -> (i32, i32) {
    %c0_i32 = arith.constant 0 : i32
    %c0_i32_0 = arith.constant 0 : i32
    return %arg1, %c0_i32 : i32, i32
  }
  func.func @transform_4(%arg0: i32, %arg1: i32) -> (i32, i32) {
    %c0_i32 = arith.constant 0 : i32
    %c0_i32_0 = arith.constant 0 : i32
    %c0_i32_1 = arith.constant 0 : i32
    return %c0_i32, %c0_i32_0 : i32, i32
  }
  func.func @transform_5(%arg0: i32, %arg1: i32) -> (i32, i32) {
    %c0_i32 = arith.constant 0 : i32
    %c0_i32_0 = arith.constant 0 : i32
    %c0_i32_1 = arith.constant 0 : i32
    return %c0_i32, %c0_i32_0 : i32, i32
  }
  func.func @transform_6(%arg0: i32, %arg1: i32) -> (i32, i32) {
    %c0_i32 = arith.constant 0 : i32
    %c0_i32_0 = arith.constant 0 : i32
    %c0_i32_1 = arith.constant 0 : i32
    return %c0_i32, %c0_i32_0 : i32, i32
  }
  func.func @transform_7(%arg0: i32, %arg1: i32) -> (i32, i32) {
    %c0_i32 = arith.constant 0 : i32
    %c0_i32_0 = arith.constant 0 : i32
    return %arg0, %c0_i32 : i32, i32
  }
}

</mosaic_0001>

<llo_original>
// kernel: tpu_custom_call.1
$region0: #{tpu_custom_call.1}
  #allocation0 [shape = 'u32[]', space=smem, size = 0x4, offset = 0x4, fixed_abs, tag = 'smem constant byte address 0x4 - core index']
  #allocation1 [shape = 'u32[144,128]{1,0:T(1,128)}', space=vmem, size = 0x12000, scoped, tag = 'internal scratch']
  #allocation2 [shape = 'f32[256,128]{1,0:T(8,128)}', space=vmem, size = 0x20000, scoped, tag = 'scratch operand']
  %s0 = inlined_call_operand.hbm [shape: f32[512,128], index: 0, kind: input, shape index: {}]
  %s1 = inlined_call_operand.hbm [shape: bf16[128,512], index: 1, kind: input, shape index: {}]
  %s2 = inlined_call_operand.vmem [shape: f32[1,512], index: 2, kind: input, shape index: {}]
  %s3 = inlined_call_operand.hbm [shape: bf16[512,128], index: 3, kind: input, shape index: {}]
  %s4 = inlined_call_operand.vmem [shape: f32[1,128], index: 4, kind: input, shape index: {}]
  %s5 = inlined_call_operand.vmem [shape: f32[1,128], index: 5, kind: input, shape index: {}]
  %s6 = inlined_call_operand.vmem [shape: f32[1,128], index: 6, kind: input, shape index: {}]
  %s7 = inlined_call_operand.hbm [shape: f32[512,128], index: 7, kind: output, shape index: {}]
  %s8 = sld [smem:[#allocation0]]
  $region81: #{tpu_custom_call.1} parent=0
    _
  %s10 = ssub.s32 1, %s8
  %s11 = scalar_select 0, %s10, %s8
  $region1: #{tpu_custom_call.1} parent=0
    #allocation3 [shape = 'u8[262144]{0}', space=vmem, size = 0x40000, scoped, tag = 'input window, operand 0']
    #allocation4 [shape = 's32[2]{0}', space=sflag, size = 0x8, scoped, tag = 'scoped memory for tpu_custom_call.1']
    #allocation5 [shape = 's32[2]{0}', space=sflag, size = 0x8, scoped, tag = 'scoped memory for tpu_custom_call.1']
    #allocation6 [shape = 'u8[131072]{0}', space=vmem, size = 0x20000, scoped, tag = 'input window, operand 1']
    #allocation7 [shape = 's32[2]{0}', space=sflag, size = 0x8, scoped, tag = 'scoped memory for tpu_custom_call.1']
    #allocation8 [shape = 'u8[131072]{0}', space=vmem, size = 0x20000, scoped, tag = 'input window, operand 3']
    #allocation9 [shape = 'u8[262144]{0}', space=vmem, size = 0x40000, scoped, tag = 'output window, operand 0']
    %12 = vsyncpa [#allocation4], 0
    %s13 = scalar_lea.sflag [#allocation4], 1
    %14 = vsyncpa %s13, 0
    %15 = vsyncpa [#allocation7], 0
    %s16 = scalar_lea.sflag [#allocation7], 1
    %17 = vsyncpa %s16, 0
    %18 = vsyncpa [#allocation5], 0
    %s19 = scalar_lea.sflag [#allocation5], 1
    %20 = vsyncpa %s19, 0
    loop: start=0, step=1, limit=6
    $region2: #{tpu_custom_call.1} parent=1 // loop_pre_header
      _
    $region3: #{tpu_custom_call.1} parent=1 // loop_header
      %s22 = sphi 0, %s26
      %p23 = scmp.ge.s32.totalorder %s22, 6
      %s29 = sphi 0, %s41
      %s30 = sphi 0, %s37
      %s31 = sphi 0, %s29
      %s32 = sphi 0, %s30
      %s33 = sphi 0, %s31
      %s34 = sphi 0, %s32
      %s44 = sphi 0, %s46
      %s47 = sphi 0, %s44
      %s48 = sphi 0, %s47
      %s64 = sphi 0, %s48
      %s70 = sphi 0, %s72
      %s73 = sphi 0, %s70
      %s74 = sphi 0, %s73
      %s90 = sphi 0, %s74
      %s96 = sphi 0, %s98
      %s99 = sphi 0, %s96
      %s100 = sphi 0, %s99
      %s116 = sphi 0, %s100
      %s122 = sphi 0, %s124
      %s125 = sphi 0, %s122
      %s126 = sphi 0, %s125
      %s142 = sphi 0, %s126
      %s146 = sphi 0, %s146
      %s148 = sphi 0, %s146
      %s149 = sphi 0, %s148
      %s163 = sphi 0, %s149
      %s167 = sphi 0, %s167
      %s169 = sphi 0, %s167
      %s170 = sphi 0, %s169
      %s184 = sphi 0, %s170
      %s188 = sphi 0, %s188
      %s190 = sphi 0, %s188
      %s191 = sphi 0, %s190
      %s205 = sphi 0, %s191
      %s211 = sphi 0, %s213
      %s214 = sphi 0, %s211
      %s215 = sphi 0, %s214
      %s231 = sphi 0, %s215
    $region4: #{tpu_custom_call.1} parent=1 // loop_header_branch
      %25 = sbr.rel (%p23) target = $region8
    $region5: #{tpu_custom_call.1} parent=1 // loop_body
      %s27 = ssub.s32 %s22, 1
      %s28 = ssub.s32 %s22, 2
      %s35 = sadd.s32 1, %s30
      %p36 = scmp.ge.s32.totalorder %s35, 2
      %s37 = scalar_select %p36, 0, %s35
      %s38 = sadd.s32 1, %s29
      %s39 = scalar_select %p36, %s38, %s29
      %p40 = scmp.ge.s32.totalorder %s39, 2
      %s41 = scalar_select %p40, 0, %s39
      %s42 = ssub.s32 %s29, %s41
      %p43 = scmp.eq.s32.totalorder %s42, 0
      %s45 = sadd.s32 %s44, 1
      %s46 = scalar_select %p43, %s44, %s45
      %p49 = pneg %p43
      %p50 = scmp.eq.s32.totalorder %s22, 3
      %p51 = por %p49, %p50
      %p52 = scmp.ne.s32.totalorder %s44, %s47
      %p53 = scmp.eq.s32.totalorder %s22, 0
      %p54 = por %p52, %p53
      %p55 = scmp.ne.s32.totalorder %s44, %s47
      %p56 = scmp.eq.s32.totalorder %s27, 3
      %p57 = por %p55, %p56
      %p58 = scmp.ne.s32.totalorder %s47, %s48
      %p59 = scmp.eq.s32.totalorder %s27, 0
      %p60 = por %p58, %p59
      %p61 = scmp.ne.s32.totalorder %s47, %s48
      %p62 = scmp.eq.s32.totalorder %s28, 3
      %p63 = por %p61, %p62
      %p65 = scmp.ne.s32.totalorder %s48, %s64
      %p66 = scmp.eq.s32.totalorder %s28, 0
      %p67 = por %p65, %p66
      %s68 = ssub.s32 %s30, %s37
      %p69 = scmp.eq.s32.totalorder %s68, 0
      %s71 = sadd.s32 %s70, 1
      %s72 = scalar_select %p69, %s70, %s71
      %p75 = pneg %p69
      %p76 = scmp.eq.s32.totalorder %s22, 3
      %p77 = por %p75, %p76
      %p78 = scmp.ne.s32.totalorder %s70, %s73
      %p79 = scmp.eq.s32.totalorder %s22, 0
      %p80 = por %p78, %p79
      %p81 = scmp.ne.s32.totalorder %s70, %s73
      %p82 = scmp.eq.s32.totalorder %s27, 3
      %p83 = por %p81, %p82
      %p84 = scmp.ne.s32.totalorder %s73, %s74
      %p85 = scmp.eq.s32.totalorder %s27, 0
      %p86 = por %p84, %p85
      %p87 = scmp.ne.s32.totalorder %s73, %s74
      %p88 = scmp.eq.s32.totalorder %s28, 3
      %p89 = por %p87, %p88
      %p91 = scmp.ne.s32.totalorder %s74, %s90
      %p92 = scmp.eq.s32.totalorder %s28, 0
      %p93 = por %p91, %p92
      %s94 = ssub.s32 %s30, %s37
      %p95 = scmp.eq.s32.totalorder %s94, 0
      %s97 = sadd.s32 %s96, 1
      %s98 = scalar_select %p95, %s96, %s97
      %p101 = pneg %p95
      %p102 = scmp.eq.s32.totalorder %s22, 3
      %p103 = por %p101, %p102
      %p104 = scmp.ne.s32.totalorder %s96, %s99
      %p105 = scmp.eq.s32.totalorder %s22, 0
      %p106 = por %p104, %p105
      %p107 = scmp.ne.s32.totalorder %s96, %s99
      %p108 = scmp.eq.s32.totalorder %s27, 3
      %p109 = por %p107, %p108
      %p110 = scmp.ne.s32.totalorder %s99, %s100
      %p111 = scmp.eq.s32.totalorder %s27, 0
      %p112 = por %p110, %p111
      %p113 = scmp.ne.s32.totalorder %s99, %s100
      %p114 = scmp.eq.s32.totalorder %s28, 3
      %p115 = por %p113, %p114
      %p117 = scmp.ne.s32.totalorder %s100, %s116
      %p118 = scmp.eq.s32.totalorder %s28, 0
      %p119 = por %p117, %p118
      %s120 = ssub.s32 %s30, %s37
      %p121 = scmp.eq.s32.totalorder %s120, 0
      %s123 = sadd.s32 %s122, 1
      %s124 = scalar_select %p121, %s122, %s123
      %p127 = pneg %p121
      %p128 = scmp.eq.s32.totalorder %s22, 3
      %p129 = por %p127, %p128
      %p130 = scmp.ne.s32.totalorder %s122, %s125
      %p131 = scmp.eq.s32.totalorder %s22, 0
      %p132 = por %p130, %p131
      %p133 = scmp.ne.s32.totalorder %s122, %s125
      %p134 = scmp.eq.s32.totalorder %s27, 3
      %p135 = por %p133, %p134
      %p136 = scmp.ne.s32.totalorder %s125, %s126
      %p137 = scmp.eq.s32.totalorder %s27, 0
      %p138 = por %p136, %p137
      %p139 = scmp.ne.s32.totalorder %s125, %s126
      %p140 = scmp.eq.s32.totalorder %s28, 3
      %p141 = por %p139, %p140
      %p143 = scmp.ne.s32.totalorder %s126, %s142
      %p144 = scmp.eq.s32.totalorder %s28, 0
      %p145 = por %p143, %p144
      %s147 = sadd.s32 %s146, 1
      %p150 = scmp.eq.s32.totalorder %s22, 3
      %p151 = scmp.ne.s32.totalorder %s146, %s148
      %p152 = scmp.eq.s32.totalorder %s22, 0
      %p153 = por %p151, %p152
      %p154 = scmp.ne.s32.totalorder %s146, %s148
      %p155 = scmp.eq.s32.totalorder %s27, 3
      %p156 = por %p154, %p155
      %p157 = scmp.ne.s32.totalorder %s148, %s149
      %p158 = scmp.eq.s32.totalorder %s27, 0
      %p159 = por %p157, %p158
      %p160 = scmp.ne.s32.totalorder %s148, %s149
      %p161 = scmp.eq.s32.totalorder %s28, 3
      %p162 = por %p160, %p161
      %p164 = scmp.ne.s32.totalorder %s149, %s163
      %p165 = scmp.eq.s32.totalorder %s28, 0
      %p166 = por %p164, %p165
      %s168 = sadd.s32 %s167, 1
      %p171 = scmp.eq.s32.totalorder %s22, 3
      %p172 = scmp.ne.s32.totalorder %s167, %s169
      %p173 = scmp.eq.s32.totalorder %s22, 0
      %p174 = por %p172, %p173
      %p175 = scmp.ne.s32.totalorder %s167, %s169
      %p176 = scmp.eq.s32.totalorder %s27, 3
      %p177 = por %p175, %p176
      %p178 = scmp.ne.s32.totalorder %s169, %s170
      %p179 = scmp.eq.s32.totalorder %s27, 0
      %p180 = por %p178, %p179
      %p181 = scmp.ne.s32.totalorder %s169, %s170
      %p182 = scmp.eq.s32.totalorder %s28, 3
      %p183 = por %p181, %p182
      %p185 = scmp.ne.s32.totalorder %s170, %s184
      %p186 = scmp.eq.s32.totalorder %s28, 0
      %p187 = por %p185, %p186
      %s189 = sadd.s32 %s188, 1
      %p192 = scmp.eq.s32.totalorder %s22, 3
      %p193 = scmp.ne.s32.totalorder %s188, %s190
      %p194 = scmp.eq.s32.totalorder %s22, 0
      %p195 = por %p193, %p194
      %p196 = scmp.ne.s32.totalorder %s188, %s190
      %p197 = scmp.eq.s32.totalorder %s27, 3
      %p198 = por %p196, %p197
      %p199 = scmp.ne.s32.totalorder %s190, %s191
      %p200 = scmp.eq.s32.totalorder %s27, 0
      %p201 = por %p199, %p200
      %p202 = scmp.ne.s32.totalorder %s190, %s191
      %p203 = scmp.eq.s32.totalorder %s28, 3
      %p204 = por %p202, %p203
      %p206 = scmp.ne.s32.totalorder %s191, %s205
      %p207 = scmp.eq.s32.totalorder %s28, 0
      %p208 = por %p206, %p207
      %s209 = ssub.s32 %s29, %s41
      %p210 = scmp.eq.s32.totalorder %s209, 0
      %s212 = sadd.s32 %s211, 1
      %s213 = scalar_select %p210, %s211, %s212
      %p216 = pneg %p210
      %p217 = scmp.eq.s32.totalorder %s22, 3
      %p218 = por %p216, %p217
      %p219 = scmp.ne.s32.totalorder %s211, %s214
      %p220 = scmp.eq.s32.totalorder %s22, 0
      %p221 = por %p219, %p220
      %p222 = scmp.ne.s32.totalorder %s211, %s214
      %p223 = scmp.eq.s32.totalorder %s27, 3
      %p224 = por %p222, %p223
      %p225 = scmp.ne.s32.totalorder %s214, %s215
      %p226 = scmp.eq.s32.totalorder %s27, 0
      %p227 = por %p225, %p226
      %p228 = scmp.ne.s32.totalorder %s214, %s215
      %p229 = scmp.eq.s32.totalorder %s28, 3
      %p230 = por %p228, %p229
      %p232 = scmp.ne.s32.totalorder %s215, %s231
      %p233 = scmp.eq.s32.totalorder %s28, 0
      %p234 = por %p232, %p233
      %p235 = scmp.le.s32.totalorder 1, %s22
      %p236 = scmp.lt.s32.totalorder %s22, 5
      %p237 = pnand %p235, %p236
      %p238 = pneg %p237
      // Predicated region
      $region9: #{tpu_custom_call.1} parent=5 // pred_check
        _
      $region10: #{tpu_custom_call.1} parent=5 // pred_check_branch
        %240 = sbr.rel (%p237) target = $region12
      $region11: #{tpu_custom_call.1} parent=5 // pred_region
        %s241 = ssub.s32 %s22, 1
        // Predicated region
        $region13: #{tpu_custom_call.1} parent=11 // pred_check
          %p242 = pneg %p159
        $region14: #{tpu_custom_call.1} parent=11 // pred_check_branch
          %244 = sbr.rel (%p242) target = $region16
        $region15: #{tpu_custom_call.1} parent=11 // pred_region
          _
        $region16: #{tpu_custom_call.1} parent=11 // pred_fallthru
          _
        // Predicated region
        $region17: #{tpu_custom_call.1} parent=11 // pred_check
          %p245 = pneg %p180
        $region18: #{tpu_custom_call.1} parent=11 // pred_check_branch
          %247 = sbr.rel (%p245) target = $region20
        $region19: #{tpu_custom_call.1} parent=11 // pred_region
          _
        $region20: #{tpu_custom_call.1} parent=11 // pred_fallthru
          _
        // Predicated region
        $region21: #{tpu_custom_call.1} parent=11 // pred_check
          %p248 = pneg %p201
        $region22: #{tpu_custom_call.1} parent=11 // pred_check_branch
          %250 = sbr.rel (%p248) target = $region24
        $region23: #{tpu_custom_call.1} parent=11 // pred_region
          _
        $region24: #{tpu_custom_call.1} parent=11 // pred_fallthru
          _
      $region12: #{tpu_custom_call.1} parent=5 // pred_fallthru
        _
      %p251 = scmp.lt.s32.totalorder %s22, 4
      // Predicated region
      $region25: #{tpu_custom_call.1} parent=5 // pred_check
        %p252 = pneg %p251
      $region26: #{tpu_custom_call.1} parent=5 // pred_check_branch
        %254 = sbr.rel (%p252) target = $region28
      $region27: #{tpu_custom_call.1} parent=5 // pred_region
        // Predicated region
        $region29: #{tpu_custom_call.1} parent=27 // pred_check
          %p255 = pneg %p54
        $region30: #{tpu_custom_call.1} parent=27 // pred_check_branch
          %257 = sbr.rel (%p255) target = $region32
        $region31: #{tpu_custom_call.1} parent=27 // pred_region
          %s258 = sand.u32 %s44, 1
          %s259 = scalar_lea.sflag [#allocation4], %s258
          %s260 = sand.u32 %s44, 1
          %s261 = smul.addr %s260, 256
          %s262 = scalar_lea.vmem [#allocation3], %s261
          %s263 = smul.u32 32, %s29
          %s265 = ssub.s32 4096, 4096
          %266 = vsyncadd %s259, %s265
          %s267 = smul.addr %s263, 128
          %s268 = scalar_lea.hbm %s0, %s267
          %s269 = sshll.u32 %s262, 4
          %s270 = int_to_ptr.vmem [resolvable:$true] %s269
          %275 = dma.hbm_to_vmem [thread:$0]  %s268, 4096, %s270, %s259, 128, 128, 8
        $region32: #{tpu_custom_call.1} parent=27 // pred_fallthru
          _
        // Predicated region
        $region33: #{tpu_custom_call.1} parent=27 // pred_check
          %p276 = pneg %p80
        $region34: #{tpu_custom_call.1} parent=27 // pred_check_branch
          %278 = sbr.rel (%p276) target = $region36
        $region35: #{tpu_custom_call.1} parent=27 // pred_region
          %s279 = sand.u32 %s22, 1
          %s280 = scalar_lea.sflag [#allocation7], %s279
          %s281 = sand.u32 %s70, 1
          %s282 = smul.addr %s281, 128
          %s283 = scalar_lea.vmem [#allocation6], %s282
          %s284 = smul.u32 2, %s30
          %s286 = ssub.s32 2048, 2048
          %287 = vsyncadd %s280, %s286
          %s288 = smul.addr %s284, 64
          %s289 = scalar_lea.hbm %s1, %s288
          %s290 = sshll.u32 %s283, 4
          %s291 = int_to_ptr.vmem [resolvable:$true] %s290
          %296 = dma.hbm_to_vmem [thread:$0]  %s289, 2048, %s291, %s280, 256, 128, 8
        $region36: #{tpu_custom_call.1} parent=27 // pred_fallthru
          _
        // Predicated region
        $region37: #{tpu_custom_call.1} parent=27 // pred_check
          %p297 = pneg %p106
        $region38: #{tpu_custom_call.1} parent=27 // pred_check_branch
          %299 = sbr.rel (%p297) target = $region40
        $region39: #{tpu_custom_call.1} parent=27 // pred_region
          %s300 = smul.u32 2, %s30
          %p301 = scmp.lt.s32.totalorder %s300, 3
          %s302 = scalar_select %p301, %s300, 3
          %s303 = scalar_lea.vmem %s2, %s302
          %s304 = smul.u32 2, %s30
        $region40: #{tpu_custom_call.1} parent=27 // pred_fallthru
          _
        // Predicated region
        $region41: #{tpu_custom_call.1} parent=27 // pred_check
          %p305 = pneg %p132
        $region42: #{tpu_custom_call.1} parent=27 // pred_check_branch
          %307 = sbr.rel (%p305) target = $region44
        $region43: #{tpu_custom_call.1} parent=27 // pred_region
          %s308 = sand.u32 %s22, 1
          %s309 = scalar_lea.sflag [#allocation7], %s308
          %s310 = sand.u32 %s122, 1
          %s311 = smul.addr %s310, 128
          %s312 = scalar_lea.vmem [#allocation8], %s311
          %s313 = smul.u32 32, %s30
          %s315 = ssub.s32 2048, 2048
          %316 = vsyncadd %s309, %s315
          %s317 = smul.addr %s313, 64
          %s318 = scalar_lea.hbm %s3, %s317
          %s319 = sshll.u32 %s312, 4
          %s320 = int_to_ptr.vmem [resolvable:$true] %s319
          %325 = dma.hbm_to_vmem [thread:$0]  %s318, 2048, %s320, %s309, 64, 64, 4
        $region44: #{tpu_custom_call.1} parent=27 // pred_fallthru
          _
      $region28: #{tpu_custom_call.1} parent=5 // pred_fallthru
        _
      %p326 = scmp.le.s32.totalorder 1, %s22
      %p327 = scmp.lt.s32.totalorder %s22, 5
      %p328 = pnand %p326, %p327
      %p329 = pneg %p328
      // Predicated region
      $region45: #{tpu_custom_call.1} parent=5 // pred_check
        _
      $region46: #{tpu_custom_call.1} parent=5 // pred_check_branch
        %331 = sbr.rel (%p328) target = $region48
      $region47: #{tpu_custom_call.1} parent=5 // pred_region
        %s332 = ssub.s32 %s22, 1
        %s333 = sand.u32 %s47, 1
        %s334 = scalar_lea.sflag [#allocation4], %s333
        %s335 = sand.u32 %s47, 1
        %s336 = smul.addr %s335, 256
        %s337 = scalar_lea.vmem [#allocation3], %s336
        // Predicated region
        $region49: #{tpu_custom_call.1} parent=47 // pred_check
          %p338 = pneg %p60
        $region50: #{tpu_custom_call.1} parent=47 // pred_check_branch
          %340 = sbr.rel (%p338) target = $region52
        $region51: #{tpu_custom_call.1} parent=47 // pred_region
          %341 = dma.done %s334, 4096
        $region52: #{tpu_custom_call.1} parent=47 // pred_fallthru
          _
        %s342 = sand.u32 %s27, 1
        %s343 = scalar_lea.sflag [#allocation7], %s342
        %s344 = sand.u32 %s73, 1
        %s345 = smul.addr %s344, 128
        %s346 = scalar_lea.vmem [#allocation6], %s345
        // Predicated region
        $region53: #{tpu_custom_call.1} parent=47 // pred_check
          %p347 = pneg %p86
        $region54: #{tpu_custom_call.1} parent=47 // pred_check_branch
          %349 = sbr.rel (%p347) target = $region56
        $region55: #{tpu_custom_call.1} parent=47 // pred_region
          %350 = dma.done %s343, 2048
        $region56: #{tpu_custom_call.1} parent=47 // pred_fallthru
          _
        %s351 = sand.u32 %s27, 1
        %s352 = scalar_lea.sflag [#allocation7], %s351
        %s353 = sand.u32 %s125, 1
        %s354 = smul.addr %s353, 128
        %s355 = scalar_lea.vmem [#allocation8], %s354
        // Predicated region
        $region57: #{tpu_custom_call.1} parent=47 // pred_check
          %p356 = pneg %p138
        $region58: #{tpu_custom_call.1} parent=47 // pred_check_branch
          %358 = sbr.rel (%p356) target = $region60
        $region59: #{tpu_custom_call.1} parent=47 // pred_region
          %359 = dma.done %s352, 2048
        $region60: #{tpu_custom_call.1} parent=47 // pred_fallthru
          _
        %s360 = sand.u32 %s47, 1
        %s361 = scalar_lea.sflag [#allocation4], %s360
        %s362 = sand.u32 %s47, 1
        %s363 = smul.addr %s362, 256
        %s364 = scalar_lea.vmem [#allocation3], %s363
        %p365 = pneg %p60
        %p366 = pneg %p57
        %s367 = sand.u32 %s27, 1
        %s368 = scalar_lea.sflag [#allocation7], %s367
        %s369 = sand.u32 %s73, 1
        %s370 = smul.addr %s369, 128
        %s371 = scalar_lea.vmem [#allocation6], %s370
        %p372 = pneg %p86
        %p373 = pneg %p83
        %s374 = smul.u32 2, %s32
        %p375 = scmp.lt.s32.totalorder %s374, 3
        %s376 = scalar_select %p375, %s374, 3
        %s377 = scalar_lea.vmem %s2, %s376
        %p378 = pneg %p112
        %p379 = pneg %p109
        %s380 = sand.u32 %s27, 1
        %s381 = scalar_lea.sflag [#allocation7], %s380
        %s382 = sand.u32 %s125, 1
        %s383 = smul.addr %s382, 128
        %s384 = scalar_lea.vmem [#allocation8], %s383
        %p385 = pneg %p138
        %p386 = pneg %p135
        %p387 = pneg %p159
        %p388 = pneg %p156
        %p389 = pneg %p180
        %p390 = pneg %p177
        %p391 = pneg %p201
        %p392 = pneg %p198
        %p393 = pneg %p227
        %p394 = pneg %p224
        %s395 = sand.u32 %s214, 1
        %s396 = scalar_lea.sflag [#allocation5], %s395
        %s397 = sand.u32 %s214, 1
        %s398 = smul.addr %s397, 256
        %s399 = scalar_lea.vmem [#allocation9], %s398
        %s400 = smul.u32 32, %s31
        %s401 = smul.u32 2, %s32
        %s402 = smul.u32 2, %s32
        %p403 = scmp.lt.s32.totalorder %s402, 3
        %s404 = scalar_select %p403, %s402, 3
        %s405 = scalar_lea.vmem %s2, %s404
        %s406 = smul.u32 2, %s32
        %s407 = smul.u32 32, %s32
        %s408 = smul.u32 32, %s31
        %p410 = scmp.eq.s32.totalorder %s32, 0
        // Predicated region
        $region61: #{tpu_custom_call.1} parent=47 // pred_check
          %p411 = pneg %p410
        $region62: #{tpu_custom_call.1} parent=47 // pred_check_branch
          %413 = sbr.rel (%p411) target = $region64
        $region63: #{tpu_custom_call.1} parent=47 // pred_region
          %414 = vst [vmem:[#allocation2] sm:$0xff] 0.0
          %415 = vst [vmem:[#allocation2 + $0x8] sm:$0xff] 0.0
          %416 = vst [vmem:[#allocation2 + $0x10] sm:$0xff] 0.0
          %417 = vst [vmem:[#allocation2 + $0x18] sm:$0xff] 0.0
          %418 = vst [vmem:[#allocation2 + $0x20] sm:$0xff] 0.0
          %419 = vst [vmem:[#allocation2 + $0x28] sm:$0xff] 0.0
          %420 = vst [vmem:[#allocation2 + $0x30] sm:$0xff] 0.0
          %421 = vst [vmem:[#allocation2 + $0x38] sm:$0xff] 0.0
          %422 = vst [vmem:[#allocation2 + $0x40] sm:$0xff] 0.0
          %423 = vst [vmem:[#allocation2 + $0x48] sm:$0xff] 0.0
          %424 = vst [vmem:[#allocation2 + $0x50] sm:$0xff] 0.0
          %425 = vst [vmem:[#allocation2 + $0x58] sm:$0xff] 0.0
          %426 = vst [vmem:[#allocation2 + $0x60] sm:$0xff] 0.0
          %427 = vst [vmem:[#allocation2 + $0x68] sm:$0xff] 0.0
          %428 = vst [vmem:[#allocation2 + $0x70] sm:$0xff] 0.0
          %429 = vst [vmem:[#allocation2 + $0x78] sm:$0xff] 0.0
          %430 = vst [vmem:[#allocation2 + $0x80] sm:$0xff] 0.0
          %431 = vst [vmem:[#allocation2 + $0x88] sm:$0xff] 0.0
          %432 = vst [vmem:[#allocation2 + $0x90] sm:$0xff] 0.0
          %433 = vst [vmem:[#allocation2 + $0x98] sm:$0xff] 0.0
          %434 = vst [vmem:[#allocation2 + $0xa0] sm:$0xff] 0.0
          %435 = vst [vmem:[#allocation2 + $0xa8] sm:$0xff] 0.0
          %436 = vst [vmem:[#allocation2 + $0xb0] sm:$0xff] 0.0
          %437 = vst [vmem:[#allocation2 + $0xb8] sm:$0xff] 0.0
          %438 = vst [vmem:[#allocation2 + $0xc0] sm:$0xff] 0.0
          %439 = vst [vmem:[#allocation2 + $0xc8] sm:$0xff] 0.0
          %440 = vst [vmem:[#allocation2 + $0xd0] sm:$0xff] 0.0
          %441 = vst [vmem:[#allocation2 + $0xd8] sm:$0xff] 0.0
          %442 = vst [vmem:[#allocation2 + $0xe0] sm:$0xff] 0.0
          %443 = vst [vmem:[#allocation2 + $0xe8] sm:$0xff] 0.0
          %444 = vst [vmem:[#allocation2 + $0xf0] sm:$0xff] 0.0
          %445 = vst [vmem:[#allocation2 + $0xf8] sm:$0xff] 0.0
        $region64: #{tpu_custom_call.1} parent=47 // pred_fallthru
          _
        %v446 = vld [vmem:[%s337] sm:$0xff]
        %v447 = vld [vmem:[%s337 + $0x8] sm:$0xff]
        %v448 = vld [vmem:[%s337 + $0x10] sm:$0xff]
        %v449 = vld [vmem:[%s337 + $0x18] sm:$0xff]
        %v450 = vld [vmem:[%s337 + $0x20] sm:$0xff]
        %v451 = vld [vmem:[%s337 + $0x28] sm:$0xff]
        %v452 = vld [vmem:[%s337 + $0x30] sm:$0xff]
        %v453 = vld [vmem:[%s337 + $0x38] sm:$0xff]
        %v454 = vld [vmem:[%s337 + $0x40] sm:$0xff]
        %v455 = vld [vmem:[%s337 + $0x48] sm:$0xff]
        %v456 = vld [vmem:[%s337 + $0x50] sm:$0xff]
        %v457 = vld [vmem:[%s337 + $0x58] sm:$0xff]
        %v458 = vld [vmem:[%s337 + $0x60] sm:$0xff]
        %v459 = vld [vmem:[%s337 + $0x68] sm:$0xff]
        %v460 = vld [vmem:[%s337 + $0x70] sm:$0xff]
        %v461 = vld [vmem:[%s337 + $0x78] sm:$0xff]
        %v462 = vld [vmem:[%s337 + $0x80] sm:$0xff]
        %v463 = vld [vmem:[%s337 + $0x88] sm:$0xff]
        %v464 = vld [vmem:[%s337 + $0x90] sm:$0xff]
        %v465 = vld [vmem:[%s337 + $0x98] sm:$0xff]
        %v466 = vld [vmem:[%s337 + $0xa0] sm:$0xff]
        %v467 = vld [vmem:[%s337 + $0xa8] sm:$0xff]
        %v468 = vld [vmem:[%s337 + $0xb0] sm:$0xff]
        %v469 = vld [vmem:[%s337 + $0xb8] sm:$0xff]
        %v470 = vld [vmem:[%s337 + $0xc0] sm:$0xff]
        %v471 = vld [vmem:[%s337 + $0xc8] sm:$0xff]
        %v472 = vld [vmem:[%s337 + $0xd0] sm:$0xff]
        %v473 = vld [vmem:[%s337 + $0xd8] sm:$0xff]
        %v474 = vld [vmem:[%s337 + $0xe0] sm:$0xff]
        %v475 = vld [vmem:[%s337 + $0xe8] sm:$0xff]
        %v476 = vld [vmem:[%s337 + $0xf0] sm:$0xff]
        %v477 = vld [vmem:[%s337 + $0xf8] sm:$0xff]
        %v478 = vpack.c.bf16 %v447, %v446
        %v479 = vpack.c.bf16 %v449, %v448
        %v480 = vpack.c.bf16 %v451, %v450
        %v481 = vpack.c.bf16 %v453, %v452
        %v482 = vpack.c.bf16 %v455, %v454
        %v483 = vpack.c.bf16 %v457, %v456
        %v484 = vpack.c.bf16 %v459, %v458
        %v485 = vpack.c.bf16 %v461, %v460
        %v486 = vpack.c.bf16 %v463, %v462
        %v487 = vpack.c.bf16 %v465, %v464
        %v488 = vpack.c.bf16 %v467, %v466
        %v489 = vpack.c.bf16 %v469, %v468
        %v490 = vpack.c.bf16 %v471, %v470
        %v491 = vpack.c.bf16 %v473, %v472
        %v492 = vpack.c.bf16 %v475, %v474
        %v493 = vpack.c.bf16 %v477, %v476
        %v494 = vld [vmem:[%s346] sm:$0xff]
        %v495 = vld [vmem:[%s346 + $0x8] sm:$0xff]
        %v496 = vld [vmem:[%s346 + $0x10] sm:$0xff]
        %v497 = vld [vmem:[%s346 + $0x18] sm:$0xff]
        %v498 = vld [vmem:[%s346 + $0x20] sm:$0xff]
        %v499 = vld [vmem:[%s346 + $0x28] sm:$0xff]
        %v500 = vld [vmem:[%s346 + $0x30] sm:$0xff]
        %v501 = vld [vmem:[%s346 + $0x38] sm:$0xff]
        %v502 = vld [vmem:[%s346 + $0x40] sm:$0xff]
        %v503 = vld [vmem:[%s346 + $0x48] sm:$0xff]
        %v504 = vld [vmem:[%s346 + $0x50] sm:$0xff]
        %v505 = vld [vmem:[%s346 + $0x58] sm:$0xff]
        %v506 = vld [vmem:[%s346 + $0x60] sm:$0xff]
        %v507 = vld [vmem:[%s346 + $0x68] sm:$0xff]
        %v508 = vld [vmem:[%s346 + $0x70] sm:$0xff]
        %v509 = vld [vmem:[%s346 + $0x78] sm:$0xff]
        %v510 = vld [vmem:[%s405] sm:$0x3]
        %v512 = vlaneseq
        %v513 = vshrl.u32 %v512, 7
        %v514 = vsub.s32 0, %v513
        %v515 = vrot.slane %v510, %v514
        %v516 = vlaneseq
        %v517 = vshrl.u32 %v516, 7
        %v518 = vsub.s32 1, %v517
        %v519 = vrot.slane %v510, %v518
        %v538 = vunpack.c.l.b16 %v494
        %v539 = vunpack.c.h.b16 %v494
        %v540 = vunpack.c.l.b16 %v495
        %v541 = vunpack.c.h.b16 %v495
        %v542 = vunpack.c.l.b16 %v496
        %v543 = vunpack.c.h.b16 %v496
        %v544 = vunpack.c.l.b16 %v497
        %v545 = vunpack.c.h.b16 %v497
        %v546 = vunpack.c.l.b16 %v498
        %v547 = vunpack.c.h.b16 %v498
        %v548 = vunpack.c.l.b16 %v499
        %v549 = vunpack.c.h.b16 %v499
        %v550 = vunpack.c.l.b16 %v500
        %v551 = vunpack.c.h.b16 %v500
        %v552 = vunpack.c.l.b16 %v501
        %v553 = vunpack.c.h.b16 %v501
        %v554 = vunpack.c.l.b16 %v502
        %v555 = vunpack.c.h.b16 %v502
        %v556 = vunpack.c.l.b16 %v503
        %v557 = vunpack.c.h.b16 %v503
        %v558 = vunpack.c.l.b16 %v504
        %v559 = vunpack.c.h.b16 %v504
        %v560 = vunpack.c.l.b16 %v505
        %v561 = vunpack.c.h.b16 %v505
        %v562 = vunpack.c.l.b16 %v506
        %v563 = vunpack.c.h.b16 %v506
        %v564 = vunpack.c.l.b16 %v507
        %v565 = vunpack.c.h.b16 %v507
        %v566 = vunpack.c.l.b16 %v508
        %v567 = vunpack.c.h.b16 %v508
        %v568 = vunpack.c.l.b16 %v509
        %v569 = vunpack.c.h.b16 %v509
        %v570 = vpack.c.b16 %v540, %v538
        %v571 = vpack.c.b16 %v541, %v539
        %v572 = vpack.c.b16 %v544, %v542
        %v573 = vpack.c.b16 %v545, %v543
        %v574 = vpack.c.b16 %v548, %v546
        %v575 = vpack.c.b16 %v549, %v547
        %v576 = vpack.c.b16 %v552, %v550
        %v577 = vpack.c.b16 %v553, %v551
        %v578 = vpack.c.b16 %v556, %v554
        %v579 = vpack.c.b16 %v557, %v555
        %v580 = vpack.c.b16 %v560, %v558
        %v581 = vpack.c.b16 %v561, %v559
        %v582 = vpack.c.b16 %v564, %v562
        %v583 = vpack.c.b16 %v565, %v563
        %v584 = vpack.c.b16 %v568, %v566
        %v585 = vpack.c.b16 %v569, %v567
        %602 = vmatprep.subr.bf16.mxu0 %v571
        %603 = vmatpush1.bf16.msra.mxu0 %v570
        %604 = vmatprep.subr.bf16.mxu0 %v573
        %605 = vmatpush1.bf16.msra.mxu0 %v572
        %606 = vmatprep.subr.bf16.mxu0 %v575
        %607 = vmatpush1.bf16.msra.mxu0 %v574
        %608 = vmatprep.subr.bf16.mxu0 %v577
        %609 = vmatpush1.bf16.msra.mxu0 %v576
        %610 = vmatprep.subr.bf16.mxu0 %v579
        %611 = vmatpush1.bf16.msra.mxu0 %v578
        %612 = vmatprep.subr.bf16.mxu0 %v581
        %613 = vmatpush1.bf16.msra.mxu0 %v580
        %614 = vmatprep.subr.bf16.mxu0 %v583
        %615 = vmatpush1.bf16.msra.mxu0 %v582
        %616 = vmatprep.subr.bf16.mxu0 %v585
        %617 = vmatpush1.bf16.msra.mxu0 %v584
        %618 = vmatprep.subr.bf16.mxu0 0
        %619 = vmatpush1.bf16.msra.mxu0 0
        %620 = vmatprep.subr.bf16.mxu0 0
        %621 = vmatpush1.bf16.msra.mxu0 0
        %622 = vmatprep.subr.bf16.mxu0 0
        %623 = vmatpush1.bf16.msra.mxu0 0
        %624 = vmatprep.subr.bf16.mxu0 0
        %625 = vmatpush1.bf16.msra.mxu0 0
        %626 = vmatprep.subr.bf16.mxu0 0
        %627 = vmatpush1.bf16.msra.mxu0 0
        %628 = vmatprep.subr.bf16.mxu0 0
        %629 = vmatpush1.bf16.msra.mxu0 0
        %630 = vmatprep.subr.bf16.mxu0 0
        %631 = vmatpush1.bf16.msra.mxu0 0
        %632 = vmatprep.subr.bf16.mxu0 0
        %633 = vmatpush1.bf16.msra.mxu0 0
        %634 = vmatprep.mubr.bf16.mxu0 0
        %635 = vmatmul.mubr.bf16.gmra.mrb[0].mxu0 %v478
        %v636 = vpop.f32.mrb[0].mxu0
        %v637 = vadd.f32 %v515, %v636
        %v638 = vpop.f32.mrb[0].mxu0
        %v639 = vadd.f32 %v519, %v638
        %v640 = vpop.f32.mrb[0].mxu0
        %v641 = vadd.f32 %v515, %v640
        %v642 = vpop.f32.mrb[0].mxu0
        %v643 = vadd.f32 %v519, %v642
        %644 = vmatprep.mubr.bf16.mxu0 0
        %645 = vmatmul.mubr.bf16.gmra.mrb[0].mxu0 %v479
        %v646 = vpop.f32.mrb[0].mxu0
        %v647 = vadd.f32 %v515, %v646
        %v648 = vpop.f32.mrb[0].mxu0
        %v649 = vadd.f32 %v519, %v648
        %v650 = vpop.f32.mrb[0].mxu0
        %v651 = vadd.f32 %v515, %v650
        %v652 = vpop.f32.mrb[0].mxu0
        %v653 = vadd.f32 %v519, %v652
        %654 = vmatprep.mubr.bf16.mxu0 0
        %655 = vmatmul.mubr.bf16.gmra.mrb[0].mxu0 %v480
        %v656 = vpop.f32.mrb[0].mxu0
        %v657 = vadd.f32 %v515, %v656
        %v658 = vpop.f32.mrb[0].mxu0
        %v659 = vadd.f32 %v519, %v658
        %v660 = vpop.f32.mrb[0].mxu0
        %v661 = vadd.f32 %v515, %v660
        %v662 = vpop.f32.mrb[0].mxu0
        %v663 = vadd.f32 %v519, %v662
        %664 = vmatprep.mubr.bf16.mxu0 0
        %665 = vmatmul.mubr.bf16.gmra.mrb[0].mxu0 %v481
        %v666 = vpop.f32.mrb[0].mxu0
        %v667 = vadd.f32 %v515, %v666
        %v668 = vpop.f32.mrb[0].mxu0
        %v669 = vadd.f32 %v519, %v668
        %v670 = vpop.f32.mrb[0].mxu0
        %v671 = vadd.f32 %v515, %v670
        %v672 = vpop.f32.mrb[0].mxu0
        %v673 = vadd.f32 %v519, %v672
        %674 = vmatprep.mubr.bf16.mxu0 0
        %675 = vmatmul.mubr.bf16.gmra.mrb[0].mxu0 %v482
        %v676 = vpop.f32.mrb[0].mxu0
        %v677 = vadd.f32 %v515, %v676
        %v678 = vpop.f32.mrb[0].mxu0
        %v679 = vadd.f32 %v519, %v678
        %v680 = vpop.f32.mrb[0].mxu0
        %v681 = vadd.f32 %v515, %v680
        %v682 = vpop.f32.mrb[0].mxu0
        %v683 = vadd.f32 %v519, %v682
        %684 = vmatprep.mubr.bf16.mxu0 0
        %685 = vmatmul.mubr.bf16.gmra.mrb[0].mxu0 %v483
        %v686 = vpop.f32.mrb[0].mxu0
        %v687 = vadd.f32 %v515, %v686
        %v688 = vpop.f32.mrb[0].mxu0
        %v689 = vadd.f32 %v519, %v688
        %v690 = vpop.f32.mrb[0].mxu0
        %v691 = vadd.f32 %v515, %v690
        %v692 = vpop.f32.mrb[0].mxu0
        %v693 = vadd.f32 %v519, %v692
        %694 = vmatprep.mubr.bf16.mxu0 0
        %695 = vmatmul.mubr.bf16.gmra.mrb[0].mxu0 %v484
        %v696 = vpop.f32.mrb[0].mxu0
        %v697 = vadd.f32 %v515, %v696
        %v698 = vpop.f32.mrb[0].mxu0
        %v699 = vadd.f32 %v519, %v698
        %v700 = vpop.f32.mrb[0].mxu0
        %v701 = vadd.f32 %v515, %v700
        %v702 = vpop.f32.mrb[0].mxu0
        %v703 = vadd.f32 %v519, %v702
        %704 = vmatprep.mubr.bf16.mxu0 0
        %705 = vmatmul.mubr.bf16.gmra.mrb[0].mxu0 %v485
        %v706 = vpop.f32.mrb[0].mxu0
        %v707 = vadd.f32 %v515, %v706
        %v708 = vpop.f32.mrb[0].mxu0
        %v709 = vadd.f32 %v519, %v708
        %v710 = vpop.f32.mrb[0].mxu0
        %v711 = vadd.f32 %v515, %v710
        %v712 = vpop.f32.mrb[0].mxu0
        %v713 = vadd.f32 %v519, %v712
        %714 = vmatprep.mubr.bf16.mxu0 0
        %715 = vmatmul.mubr.bf16.gmra.mrb[0].mxu0 %v486
        %v716 = vpop.f32.mrb[0].mxu0
        %v717 = vadd.f32 %v515, %v716
        %v718 = vpop.f32.mrb[0].mxu0
        %v719 = vadd.f32 %v519, %v718
        %v720 = vpop.f32.mrb[0].mxu0
        %v721 = vadd.f32 %v515, %v720
        %v722 = vpop.f32.mrb[0].mxu0
        %v723 = vadd.f32 %v519, %v722
        %724 = vmatprep.mubr.bf16.mxu0 0
        %725 = vmatmul.mubr.bf16.gmra.mrb[0].mxu0 %v487
        %v726 = vpop.f32.mrb[0].mxu0
        %v727 = vadd.f32 %v515, %v726
        %v728 = vpop.f32.mrb[0].mxu0
        %v729 = vadd.f32 %v519, %v728
        %v730 = vpop.f32.mrb[0].mxu0
        %v731 = vadd.f32 %v515, %v730
        %v732 = vpop.f32.mrb[0].mxu0
        %v733 = vadd.f32 %v519, %v732
        %734 = vmatprep.mubr.bf16.mxu0 0
        %735 = vmatmul.mubr.bf16.gmra.mrb[0].mxu0 %v488
        %v736 = vpop.f32.mrb[0].mxu0
        %v737 = vadd.f32 %v515, %v736
        %v738 = vpop.f32.mrb[0].mxu0
        %v739 = vadd.f32 %v519, %v738
        %v740 = vpop.f32.mrb[0].mxu0
        %v741 = vadd.f32 %v515, %v740
        %v742 = vpop.f32.mrb[0].mxu0
        %v743 = vadd.f32 %v519, %v742
        %744 = vmatprep.mubr.bf16.mxu0 0
        %745 = vmatmul.mubr.bf16.gmra.mrb[0].mxu0 %v489
        %v746 = vpop.f32.mrb[0].mxu0
        %v747 = vadd.f32 %v515, %v746
        %v748 = vpop.f32.mrb[0].mxu0
        %v749 = vadd.f32 %v519, %v748
        %v750 = vpop.f32.mrb[0].mxu0
        %v751 = vadd.f32 %v515, %v750
        %v752 = vpop.f32.mrb[0].mxu0
        %v753 = vadd.f32 %v519, %v752
        %754 = vmatprep.mubr.bf16.mxu0 0
        %755 = vmatmul.mubr.bf16.gmra.mrb[0].mxu0 %v490
        %v756 = vpop.f32.mrb[0].mxu0
        %v757 = vadd.f32 %v515, %v756
        %v758 = vpop.f32.mrb[0].mxu0
        %v759 = vadd.f32 %v519, %v758
        %v760 = vpop.f32.mrb[0].mxu0
        %v761 = vadd.f32 %v515, %v760
        %v762 = vpop.f32.mrb[0].mxu0
        %v763 = vadd.f32 %v519, %v762
        %764 = vmatprep.mubr.bf16.mxu0 0
        %765 = vmatmul.mubr.bf16.gmra.mrb[0].mxu0 %v491
        %v766 = vpop.f32.mrb[0].mxu0
        %v767 = vadd.f32 %v515, %v766
        %v768 = vpop.f32.mrb[0].mxu0
        %v769 = vadd.f32 %v519, %v768
        %v770 = vpop.f32.mrb[0].mxu0
        %v771 = vadd.f32 %v515, %v770
        %v772 = vpop.f32.mrb[0].mxu0
        %v773 = vadd.f32 %v519, %v772
        %774 = vmatprep.mubr.bf16.mxu0 0
        %775 = vmatmul.mubr.bf16.gmra.mrb[0].mxu0 %v492
        %v776 = vpop.f32.mrb[0].mxu0
        %v777 = vadd.f32 %v515, %v776
        %v778 = vpop.f32.mrb[0].mxu0
        %v779 = vadd.f32 %v519, %v778
        %v780 = vpop.f32.mrb[0].mxu0
        %v781 = vadd.f32 %v515, %v780
        %v782 = vpop.f32.mrb[0].mxu0
        %v783 = vadd.f32 %v519, %v782
        %784 = vmatprep.mubr.bf16.mxu0 0
        %785 = vmatmul.mubr.bf16.gmra.mrb[0].mxu0 %v493
        %v786 = vpop.f32.mrb[0].mxu0
        %v787 = vadd.f32 %v515, %v786
        %v788 = vpop.f32.mrb[0].mxu0
        %v789 = vadd.f32 %v519, %v788
        %v790 = vpop.f32.mrb[0].mxu0
        %v791 = vadd.f32 %v515, %v790
        %v792 = vpop.f32.mrb[0].mxu0
        %v793 = vadd.f32 %v519, %v792
        %794 = vdwg.mxu0
        %v795 = vmax.f32 %v637, 0.0
        %v796 = vmax.f32 %v639, 0.0
        %v797 = vmax.f32 %v641, 0.0
        %v798 = vmax.f32 %v643, 0.0
        %v799 = vmax.f32 %v647, 0.0
        %v800 = vmax.f32 %v649, 0.0
        %v801 = vmax.f32 %v651, 0.0
        %v802 = vmax.f32 %v653, 0.0
        %v803 = vmax.f32 %v657, 0.0
        %v804 = vmax.f32 %v659, 0.0
        %v805 = vmax.f32 %v661, 0.0
        %v806 = vmax.f32 %v663, 0.0
        %v807 = vmax.f32 %v667, 0.0
        %v808 = vmax.f32 %v669, 0.0
        %v809 = vmax.f32 %v671, 0.0
        %v810 = vmax.f32 %v673, 0.0
        %v811 = vmax.f32 %v677, 0.0
        %v812 = vmax.f32 %v679, 0.0
        %v813 = vmax.f32 %v681, 0.0
        %v814 = vmax.f32 %v683, 0.0
        %v815 = vmax.f32 %v687, 0.0
        %v816 = vmax.f32 %v689, 0.0
        %v817 = vmax.f32 %v691, 0.0
        %v818 = vmax.f32 %v693, 0.0
        %v819 = vmax.f32 %v697, 0.0
        %v820 = vmax.f32 %v699, 0.0
        %v821 = vmax.f32 %v701, 0.0
        %v822 = vmax.f32 %v703, 0.0
        %v823 = vmax.f32 %v707, 0.0
        %v824 = vmax.f32 %v709, 0.0
        %v825 = vmax.f32 %v711, 0.0
        %v826 = vmax.f32 %v713, 0.0
        %v827 = vmax.f32 %v717, 0.0
        %v828 = vmax.f32 %v719, 0.0
        %v829 = vmax.f32 %v721, 0.0
        %v830 = vmax.f32 %v723, 0.0
        %v831 = vmax.f32 %v727, 0.0
        %v832 = vmax.f32 %v729, 0.0
        %v833 = vmax.f32 %v731, 0.0
        %v834 = vmax.f32 %v733, 0.0
        %v835 = vmax.f32 %v737, 0.0
        %v836 = vmax.f32 %v739, 0.0
        %v837 = vmax.f32 %v741, 0.0
        %v838 = vmax.f32 %v743, 0.0
        %v839 = vmax.f32 %v747, 0.0
        %v840 = vmax.f32 %v749, 0.0
        %v841 = vmax.f32 %v751, 0.0
        %v842 = vmax.f32 %v753, 0.0
        %v843 = vmax.f32 %v757, 0.0
        %v844 = vmax.f32 %v759, 0.0
        %v845 = vmax.f32 %v761, 0.0
        %v846 = vmax.f32 %v763, 0.0
        %v847 = vmax.f32 %v767, 0.0
        %v848 = vmax.f32 %v769, 0.0
        %v849 = vmax.f32 %v771, 0.0
        %v850 = vmax.f32 %v773, 0.0
        %v851 = vmax.f32 %v777, 0.0
        %v852 = vmax.f32 %v779, 0.0
        %v853 = vmax.f32 %v781, 0.0
        %v854 = vmax.f32 %v783, 0.0
        %v855 = vmax.f32 %v787, 0.0
        %v856 = vmax.f32 %v789, 0.0
        %v857 = vmax.f32 %v791, 0.0
        %v858 = vmax.f32 %v793, 0.0
        %v859 = vld [vmem:[#allocation2] sm:$0xff]
        %v860 = vld [vmem:[#allocation2 + $0x8] sm:$0xff]
        %v861 = vld [vmem:[#allocation2 + $0x10] sm:$0xff]
        %v862 = vld [vmem:[#allocation2 + $0x18] sm:$0xff]
        %v863 = vld [vmem:[#allocation2 + $0x20] sm:$0xff]
        %v864 = vld [vmem:[#allocation2 + $0x28] sm:$0xff]
        %v865 = vld [vmem:[#allocation2 + $0x30] sm:$0xff]
        %v866 = vld [vmem:[#allocation2 + $0x38] sm:$0xff]
        %v867 = vld [vmem:[#allocation2 + $0x40] sm:$0xff]
        %v868 = vld [vmem:[#allocation2 + $0x48] sm:$0xff]
        %v869 = vld [vmem:[#allocation2 + $0x50] sm:$0xff]
        %v870 = vld [vmem:[#allocation2 + $0x58] sm:$0xff]
        %v871 = vld [vmem:[#allocation2 + $0x60] sm:$0xff]
        %v872 = vld [vmem:[#allocation2 + $0x68] sm:$0xff]
        %v873 = vld [vmem:[#allocation2 + $0x70] sm:$0xff]
        %v874 = vld [vmem:[#allocation2 + $0x78] sm:$0xff]
        %v875 = vld [vmem:[#allocation2 + $0x80] sm:$0xff]
        %v876 = vld [vmem:[#allocation2 + $0x88] sm:$0xff]
        %v877 = vld [vmem:[#allocation2 + $0x90] sm:$0xff]
        %v878 = vld [vmem:[#allocation2 + $0x98] sm:$0xff]
        %v879 = vld [vmem:[#allocation2 + $0xa0] sm:$0xff]
        %v880 = vld [vmem:[#allocation2 + $0xa8] sm:$0xff]
        %v881 = vld [vmem:[#allocation2 + $0xb0] sm:$0xff]
        %v882 = vld [vmem:[#allocation2 + $0xb8] sm:$0xff]
        %v883 = vld [vmem:[#allocation2 + $0xc0] sm:$0xff]
        %v884 = vld [vmem:[#allocation2 + $0xc8] sm:$0xff]
        %v885 = vld [vmem:[#allocation2 + $0xd0] sm:$0xff]
        %v886 = vld [vmem:[#allocation2 + $0xd8] sm:$0xff]
        %v887 = vld [vmem:[#allocation2 + $0xe0] sm:$0xff]
        %v888 = vld [vmem:[#allocation2 + $0xe8] sm:$0xff]
        %v889 = vld [vmem:[#allocation2 + $0xf0] sm:$0xff]
        %v890 = vld [vmem:[#allocation2 + $0xf8] sm:$0xff]
        %v891 = vpack.c.bf16 %v797, %v795
        %v892 = vpack.c.bf16 %v798, %v796
        %v893 = vpack.c.bf16 %v801, %v799
        %v894 = vpack.c.bf16 %v802, %v800
        %v895 = vpack.c.bf16 %v805, %v803
        %v896 = vpack.c.bf16 %v806, %v804
        %v897 = vpack.c.bf16 %v809, %v807
        %v898 = vpack.c.bf16 %v810, %v808
        %v899 = vpack.c.bf16 %v813, %v811
        %v900 = vpack.c.bf16 %v814, %v812
        %v901 = vpack.c.bf16 %v817, %v815
        %v902 = vpack.c.bf16 %v818, %v816
        %v903 = vpack.c.bf16 %v821, %v819
        %v904 = vpack.c.bf16 %v822, %v820
        %v905 = vpack.c.bf16 %v825, %v823
        %v906 = vpack.c.bf16 %v826, %v824
        %v907 = vpack.c.bf16 %v829, %v827
        %v908 = vpack.c.bf16 %v830, %v828
        %v909 = vpack.c.bf16 %v833, %v831
        %v910 = vpack.c.bf16 %v834, %v832
        %v911 = vpack.c.bf16 %v837, %v835
        %v912 = vpack.c.bf16 %v838, %v836
        %v913 = vpack.c.bf16 %v841, %v839
        %v914 = vpack.c.bf16 %v842, %v840
        %v915 = vpack.c.bf16 %v845, %v843
        %v916 = vpack.c.bf16 %v846, %v844
        %v917 = vpack.c.bf16 %v849, %v847
        %v918 = vpack.c.bf16 %v850, %v848
        %v919 = vpack.c.bf16 %v853, %v851
        %v920 = vpack.c.bf16 %v854, %v852
        %v921 = vpack.c.bf16 %v857, %v855
        %v922 = vpack.c.bf16 %v858, %v856
        %v923 = vld [vmem:[%s355] sm:$0xf]
        %v924 = vld [vmem:[%s355 + $0x4] sm:$0xf]
        %v925 = vld [vmem:[%s355 + $0x8] sm:$0xf]
        %v926 = vld [vmem:[%s355 + $0xc] sm:$0xf]
        %v927 = vld [vmem:[%s355 + $0x10] sm:$0xf]
        %v928 = vld [vmem:[%s355 + $0x14] sm:$0xf]
        %v929 = vld [vmem:[%s355 + $0x18] sm:$0xf]
        %v930 = vld [vmem:[%s355 + $0x1c] sm:$0xf]
        %v931 = vld [vmem:[%s355 + $0x20] sm:$0xf]
        %v932 = vld [vmem:[%s355 + $0x24] sm:$0xf]
        %v933 = vld [vmem:[%s355 + $0x28] sm:$0xf]
        %v934 = vld [vmem:[%s355 + $0x2c] sm:$0xf]
        %v935 = vld [vmem:[%s355 + $0x30] sm:$0xf]
        %v936 = vld [vmem:[%s355 + $0x34] sm:$0xf]
        %v937 = vld [vmem:[%s355 + $0x38] sm:$0xf]
        %v938 = vld [vmem:[%s355 + $0x3c] sm:$0xf]
        %v939 = vld [vmem:[%s355 + $0x40] sm:$0xf]
        %v940 = vld [vmem:[%s355 + $0x44] sm:$0xf]
        %v941 = vld [vmem:[%s355 + $0x48] sm:$0xf]
        %v942 = vld [vmem:[%s355 + $0x4c] sm:$0xf]
        %v943 = vld [vmem:[%s355 + $0x50] sm:$0xf]
        %v944 = vld [vmem:[%s355 + $0x54] sm:$0xf]
        %v945 = vld [vmem:[%s355 + $0x58] sm:$0xf]
        %v946 = vld [vmem:[%s355 + $0x5c] sm:$0xf]
        %v947 = vld [vmem:[%s355 + $0x60] sm:$0xf]
        %v948 = vld [vmem:[%s355 + $0x64] sm:$0xf]
        %v949 = vld [vmem:[%s355 + $0x68] sm:$0xf]
        %v950 = vld [vmem:[%s355 + $0x6c] sm:$0xf]
        %v951 = vld [vmem:[%s355 + $0x70] sm:$0xf]
        %v952 = vld [vmem:[%s355 + $0x74] sm:$0xf]
        %v953 = vld [vmem:[%s355 + $0x78] sm:$0xf]
        %v954 = vld [vmem:[%s355 + $0x7c] sm:$0xf]
        %v987 = vunpack.c.l.b16 %v923
        %v988 = vunpack.c.l.b16 %v924
        %v989 = vunpack.c.l.b16 %v925
        %v990 = vunpack.c.l.b16 %v926
        %v991 = vunpack.c.l.b16 %v927
        %v992 = vunpack.c.l.b16 %v928
        %v993 = vunpack.c.l.b16 %v929
        %v994 = vunpack.c.l.b16 %v930
        %v995 = vunpack.c.l.b16 %v931
        %v996 = vunpack.c.l.b16 %v932
        %v997 = vunpack.c.l.b16 %v933
        %v998 = vunpack.c.l.b16 %v934
        %v999 = vunpack.c.l.b16 %v935
        %v1000 = vunpack.c.l.b16 %v936
        %v1001 = vunpack.c.l.b16 %v937
        %v1002 = vunpack.c.l.b16 %v938
        %v1003 = vunpack.c.l.b16 %v939
        %v1004 = vunpack.c.l.b16 %v940
        %v1005 = vunpack.c.l.b16 %v941
        %v1006 = vunpack.c.l.b16 %v942
        %v1007 = vunpack.c.l.b16 %v943
        %v1008 = vunpack.c.l.b16 %v944
        %v1009 = vunpack.c.l.b16 %v945
        %v1010 = vunpack.c.l.b16 %v946
        %v1011 = vunpack.c.l.b16 %v947
        %v1012 = vunpack.c.l.b16 %v948
        %v1013 = vunpack.c.l.b16 %v949
        %v1014 = vunpack.c.l.b16 %v950
        %v1015 = vunpack.c.l.b16 %v951
        %v1016 = vunpack.c.l.b16 %v952
        %v1017 = vunpack.c.l.b16 %v953
        %v1018 = vunpack.c.l.b16 %v954
        %v1019 = vpack.c.b16 %v988, %v987
        %v1020 = vpack.c.b16 %v990, %v989
        %v1021 = vpack.c.b16 %v992, %v991
        %v1022 = vpack.c.b16 %v994, %v993
        %v1023 = vpack.c.b16 %v996, %v995
        %v1024 = vpack.c.b16 %v998, %v997
        %v1025 = vpack.c.b16 %v1000, %v999
        %v1026 = vpack.c.b16 %v1002, %v1001
        %v1027 = vpack.c.b16 %v1004, %v1003
        %v1028 = vpack.c.b16 %v1006, %v1005
        %v1029 = vpack.c.b16 %v1008, %v1007
        %v1030 = vpack.c.b16 %v1010, %v1009
        %v1031 = vpack.c.b16 %v1012, %v1011
        %v1032 = vpack.c.b16 %v1014, %v1013
        %v1033 = vpack.c.b16 %v1016, %v1015
        %v1034 = vpack.c.b16 %v1018, %v1017
        %1051 = vmatprep.subr.bf16.mxu0 0
        %1052 = vmatpush1.bf16.msra.mxu0 %v1019
        %1053 = vmatprep.subr.bf16.mxu0 0
        %1054 = vmatpush1.bf16.msra.mxu0 %v1020
        %1055 = vmatprep.subr.bf16.mxu0 0
        %1056 = vmatpush1.bf16.msra.mxu0 %v1021
        %1057 = vmatprep.subr.bf16.mxu0 0
        %1058 = vmatpush1.bf16.msra.mxu0 %v1022
        %1059 = vmatprep.subr.bf16.mxu0 0
        %1060 = vmatpush1.bf16.msra.mxu0 %v1023
        %1061 = vmatprep.subr.bf16.mxu0 0
        %1062 = vmatpush1.bf16.msra.mxu0 %v1024
        %1063 = vmatprep.subr.bf16.mxu0 0
        %1064 = vmatpush1.bf16.msra.mxu0 %v1025
        %1065 = vmatprep.subr.bf16.mxu0 0
        %1066 = vmatpush1.bf16.msra.mxu0 %v1026
        %1067 = vmatprep.subr.bf16.mxu0 0
        %1068 = vmatpush1.bf16.msra.mxu0 %v1027
        %1069 = vmatprep.subr.bf16.mxu0 0
        %1070 = vmatpush1.bf16.msra.mxu0 %v1028
        %1071 = vmatprep.subr.bf16.mxu0 0
        %1072 = vmatpush1.bf16.msra.mxu0 %v1029
        %1073 = vmatprep.subr.bf16.mxu0 0
        %1074 = vmatpush1.bf16.msra.mxu0 %v1030
        %1075 = vmatprep.subr.bf16.mxu0 0
        %1076 = vmatpush1.bf16.msra.mxu0 %v1031
        %1077 = vmatprep.subr.bf16.mxu0 0
        %1078 = vmatpush1.bf16.msra.mxu0 %v1032
        %1079 = vmatprep.subr.bf16.mxu0 0
        %1080 = vmatpush1.bf16.msra.mxu0 %v1033
        %1081 = vmatprep.subr.bf16.mxu0 0
        %1082 = vmatpush1.bf16.msra.mxu0 %v1034
        %1083 = vmatprep.mubr.bf16.mxu0 %v892
        %1084 = vmatmul.mubr.bf16.gmra.mrb[0].mxu0 %v891
        %v1085 = vpop.f32.mrb[0].mxu0
        %v1086 = vadd.f32 0.0, %v1085
        %v1087 = vpop.f32.mrb[0].mxu0
        %v1088 = vpop.f32.mrb[0].mxu0
        %v1089 = vadd.f32 0.0, %v1088
        %v1090 = vpop.f32.mrb[0].mxu0
        %1091 = vmatprep.mubr.bf16.mxu0 %v894
        %1092 = vmatmul.mubr.bf16.gmra.mrb[0].mxu0 %v893
        %v1093 = vpop.f32.mrb[0].mxu0
        %v1094 = vadd.f32 0.0, %v1093
        %v1095 = vpop.f32.mrb[0].mxu0
        %v1096 = vpop.f32.mrb[0].mxu0
        %v1097 = vadd.f32 0.0, %v1096
        %v1098 = vpop.f32.mrb[0].mxu0
        %1099 = vmatprep.mubr.bf16.mxu0 %v896
        %1100 = vmatmul.mubr.bf16.gmra.mrb[0].mxu0 %v895
        %v1101 = vpop.f32.mrb[0].mxu0
        %v1102 = vadd.f32 0.0, %v1101
        %v1103 = vpop.f32.mrb[0].mxu0
        %v1104 = vpop.f32.mrb[0].mxu0
        %v1105 = vadd.f32 0.0, %v1104
        %v1106 = vpop.f32.mrb[0].mxu0
        %1107 = vmatprep.mubr.bf16.mxu0 %v898
        %1108 = vmatmul.mubr.bf16.gmra.mrb[0].mxu0 %v897
        %v1109 = vpop.f32.mrb[0].mxu0
        %v1110 = vadd.f32 0.0, %v1109
        %v1111 = vpop.f32.mrb[0].mxu0
        %v1112 = vpop.f32.mrb[0].mxu0
        %v1113 = vadd.f32 0.0, %v1112
        %v1114 = vpop.f32.mrb[0].mxu0
        %1115 = vmatprep.mubr.bf16.mxu0 %v900
        %1116 = vmatmul.mubr.bf16.gmra.mrb[0].mxu0 %v899
        %v1117 = vpop.f32.mrb[0].mxu0
        %v1118 = vadd.f32 0.0, %v1117
        %v1119 = vpop.f32.mrb[0].mxu0
        %v1120 = vpop.f32.mrb[0].mxu0
        %v1121 = vadd.f32 0.0, %v1120
        %v1122 = vpop.f32.mrb[0].mxu0
        %1123 = vmatprep.mubr.bf16.mxu0 %v902
        %1124 = vmatmul.mubr.bf16.gmra.mrb[0].mxu0 %v901
        %v1125 = vpop.f32.mrb[0].mxu0
        %v1126 = vadd.f32 0.0, %v1125
        %v1127 = vpop.f32.mrb[0].mxu0
        %v1128 = vpop.f32.mrb[0].mxu0
        %v1129 = vadd.f32 0.0, %v1128
        %v1130 = vpop.f32.mrb[0].mxu0
        %1131 = vmatprep.mubr.bf16.mxu0 %v904
        %1132 = vmatmul.mubr.bf16.gmra.mrb[0].mxu0 %v903
        %v1133 = vpop.f32.mrb[0].mxu0
        %v1134 = vadd.f32 0.0, %v1133
        %v1135 = vpop.f32.mrb[0].mxu0
        %v1136 = vpop.f32.mrb[0].mxu0
        %v1137 = vadd.f32 0.0, %v1136
        %v1138 = vpop.f32.mrb[0].mxu0
        %1139 = vmatprep.mubr.bf16.mxu0 %v906
        %1140 = vmatmul.mubr.bf16.gmra.mrb[0].mxu0 %v905
        %v1141 = vpop.f32.mrb[0].mxu0
        %v1142 = vadd.f32 0.0, %v1141
        %v1143 = vpop.f32.mrb[0].mxu0
        %v1144 = vpop.f32.mrb[0].mxu0
        %v1145 = vadd.f32 0.0, %v1144
        %v1146 = vpop.f32.mrb[0].mxu0
        %1147 = vmatprep.mubr.bf16.mxu0 %v908
        %1148 = vmatmul.mubr.bf16.gmra.mrb[0].mxu0 %v907
        %v1149 = vpop.f32.mrb[0].mxu0
        %v1150 = vadd.f32 0.0, %v1149
        %v1151 = vpop.f32.mrb[0].mxu0
        %v1152 = vpop.f32.mrb[0].mxu0
        %v1153 = vadd.f32 0.0, %v1152
        %v1154 = vpop.f32.mrb[0].mxu0
        %1155 = vmatprep.mubr.bf16.mxu0 %v910
        %1156 = vmatmul.mubr.bf16.gmra.mrb[0].mxu0 %v909
        %v1157 = vpop.f32.mrb[0].mxu0
        %v1158 = vadd.f32 0.0, %v1157
        %v1159 = vpop.f32.mrb[0].mxu0
        %v1160 = vpop.f32.mrb[0].mxu0
        %v1161 = vadd.f32 0.0, %v1160
        %v1162 = vpop.f32.mrb[0].mxu0
        %1163 = vmatprep.mubr.bf16.mxu0 %v912
        %1164 = vmatmul.mubr.bf16.gmra.mrb[0].mxu0 %v911
        %v1165 = vpop.f32.mrb[0].mxu0
        %v1166 = vadd.f32 0.0, %v1165
        %v1167 = vpop.f32.mrb[0].mxu0
        %v1168 = vpop.f32.mrb[0].mxu0
        %v1169 = vadd.f32 0.0, %v1168
        %v1170 = vpop.f32.mrb[0].mxu0
        %1171 = vmatprep.mubr.bf16.mxu0 %v914
        %1172 = vmatmul.mubr.bf16.gmra.mrb[0].mxu0 %v913
        %v1173 = vpop.f32.mrb[0].mxu0
        %v1174 = vadd.f32 0.0, %v1173
        %v1175 = vpop.f32.mrb[0].mxu0
        %v1176 = vpop.f32.mrb[0].mxu0
        %v1177 = vadd.f32 0.0, %v1176
        %v1178 = vpop.f32.mrb[0].mxu0
        %1179 = vmatprep.mubr.bf16.mxu0 %v916
        %1180 = vmatmul.mubr.bf16.gmra.mrb[0].mxu0 %v915
        %v1181 = vpop.f32.mrb[0].mxu0
        %v1182 = vadd.f32 0.0, %v1181
        %v1183 = vpop.f32.mrb[0].mxu0
        %v1184 = vpop.f32.mrb[0].mxu0
        %v1185 = vadd.f32 0.0, %v1184
        %v1186 = vpop.f32.mrb[0].mxu0
        %1187 = vmatprep.mubr.bf16.mxu0 %v918
        %1188 = vmatmul.mubr.bf16.gmra.mrb[0].mxu0 %v917
        %v1189 = vpop.f32.mrb[0].mxu0
        %v1190 = vadd.f32 0.0, %v1189
        %v1191 = vpop.f32.mrb[0].mxu0
        %v1192 = vpop.f32.mrb[0].mxu0
        %v1193 = vadd.f32 0.0, %v1192
        %v1194 = vpop.f32.mrb[0].mxu0
        %1195 = vmatprep.mubr.bf16.mxu0 %v920
        %1196 = vmatmul.mubr.bf16.gmra.mrb[0].mxu0 %v919
        %v1197 = vpop.f32.mrb[0].mxu0
        %v1198 = vadd.f32 0.0, %v1197
        %v1199 = vpop.f32.mrb[0].mxu0
        %v1200 = vpop.f32.mrb[0].mxu0
        %v1201 = vadd.f32 0.0, %v1200
        %v1202 = vpop.f32.mrb[0].mxu0
        %1203 = vmatprep.mubr.bf16.mxu0 %v922
        %1204 = vmatmul.mubr.bf16.gmra.mrb[0].mxu0 %v921
        %v1205 = vpop.f32.mrb[0].mxu0
        %v1206 = vadd.f32 0.0, %v1205
        %v1207 = vpop.f32.mrb[0].mxu0
        %v1208 = vpop.f32.mrb[0].mxu0
        %v1209 = vadd.f32 0.0, %v1208
        %v1210 = vpop.f32.mrb[0].mxu0
        %1211 = vdwg.mxu0
        %v1212 = vadd.f32 %v859, %v1086
        %v1213 = vadd.f32 %v860, %v1089
        %v1214 = vadd.f32 %v861, %v1094
        %v1215 = vadd.f32 %v862, %v1097
        %v1216 = vadd.f32 %v863, %v1102
        %v1217 = vadd.f32 %v864, %v1105
        %v1218 = vadd.f32 %v865, %v1110
        %v1219 = vadd.f32 %v866, %v1113
        %v1220 = vadd.f32 %v867, %v1118
        %v1221 = vadd.f32 %v868, %v1121
        %v1222 = vadd.f32 %v869, %v1126
        %v1223 = vadd.f32 %v870, %v1129
        %v1224 = vadd.f32 %v871, %v1134
        %v1225 = vadd.f32 %v872, %v1137
        %v1226 = vadd.f32 %v873, %v1142
        %v1227 = vadd.f32 %v874, %v1145
        %v1228 = vadd.f32 %v875, %v1150
        %v1229 = vadd.f32 %v876, %v1153
        %v1230 = vadd.f32 %v877, %v1158
        %v1231 = vadd.f32 %v878, %v1161
        %v1232 = vadd.f32 %v879, %v1166
        %v1233 = vadd.f32 %v880, %v1169
        %v1234 = vadd.f32 %v881, %v1174
        %v1235 = vadd.f32 %v882, %v1177
        %v1236 = vadd.f32 %v883, %v1182
        %v1237 = vadd.f32 %v884, %v1185
        %v1238 = vadd.f32 %v885, %v1190
        %v1239 = vadd.f32 %v886, %v1193
        %v1240 = vadd.f32 %v887, %v1198
        %v1241 = vadd.f32 %v888, %v1201
        %v1242 = vadd.f32 %v889, %v1206
        %v1243 = vadd.f32 %v890, %v1209
        %1244 = vst [vmem:[#allocation2] sm:$0xff] %v1212
        %1245 = vst [vmem:[#allocation2 + $0x8] sm:$0xff] %v1213
        %1246 = vst [vmem:[#allocation2 + $0x10] sm:$0xff] %v1214
        %1247 = vst [vmem:[#allocation2 + $0x18] sm:$0xff] %v1215
        %1248 = vst [vmem:[#allocation2 + $0x20] sm:$0xff] %v1216
        %1249 = vst [vmem:[#allocation2 + $0x28] sm:$0xff] %v1217
        %1250 = vst [vmem:[#allocation2 + $0x30] sm:$0xff] %v1218
        %1251 = vst [vmem:[#allocation2 + $0x38] sm:$0xff] %v1219
        %1252 = vst [vmem:[#allocation2 + $0x40] sm:$0xff] %v1220
        %1253 = vst [vmem:[#allocation2 + $0x48] sm:$0xff] %v1221
        %1254 = vst [vmem:[#allocation2 + $0x50] sm:$0xff] %v1222
        %1255 = vst [vmem:[#allocation2 + $0x58] sm:$0xff] %v1223
        %1256 = vst [vmem:[#allocation2 + $0x60] sm:$0xff] %v1224
        %1257 = vst [vmem:[#allocation2 + $0x68] sm:$0xff] %v1225
        %1258 = vst [vmem:[#allocation2 + $0x70] sm:$0xff] %v1226
        %1259 = vst [vmem:[#allocation2 + $0x78] sm:$0xff] %v1227
        %1260 = vst [vmem:[#allocation2 + $0x80] sm:$0xff] %v1228
        %1261 = vst [vmem:[#allocation2 + $0x88] sm:$0xff] %v1229
        %1262 = vst [vmem:[#allocation2 + $0x90] sm:$0xff] %v1230
        %1263 = vst [vmem:[#allocation2 + $0x98] sm:$0xff] %v1231
        %1264 = vst [vmem:[#allocation2 + $0xa0] sm:$0xff] %v1232
        %1265 = vst [vmem:[#allocation2 + $0xa8] sm:$0xff] %v1233
        %1266 = vst [vmem:[#allocation2 + $0xb0] sm:$0xff] %v1234
        %1267 = vst [vmem:[#allocation2 + $0xb8] sm:$0xff] %v1235
        %1268 = vst [vmem:[#allocation2 + $0xc0] sm:$0xff] %v1236
        %1269 = vst [vmem:[#allocation2 + $0xc8] sm:$0xff] %v1237
        %1270 = vst [vmem:[#allocation2 + $0xd0] sm:$0xff] %v1238
        %1271 = vst [vmem:[#allocation2 + $0xd8] sm:$0xff] %v1239
        %1272 = vst [vmem:[#allocation2 + $0xe0] sm:$0xff] %v1240
        %1273 = vst [vmem:[#allocation2 + $0xe8] sm:$0xff] %v1241
        %1274 = vst [vmem:[#allocation2 + $0xf0] sm:$0xff] %v1242
        %1275 = vst [vmem:[#allocation2 + $0xf8] sm:$0xff] %v1243
        %p1276 = scmp.eq.s32.totalorder %s32, 1
        // Predicated region
        $region65: #{tpu_custom_call.1} parent=47 // pred_check
          %p1277 = pneg %p1276
        $region66: #{tpu_custom_call.1} parent=47 // pred_check_branch
          %1279 = sbr.rel (%p1277) target = $region68
        $region67: #{tpu_custom_call.1} parent=47 // pred_region
          %v1280 = vld [vmem:[#allocation2] sm:$0xff]
          %v1281 = vld [vmem:[#allocation2 + $0x8] sm:$0xff]
          %v1282 = vld [vmem:[#allocation2 + $0x10] sm:$0xff]
          %v1283 = vld [vmem:[#allocation2 + $0x18] sm:$0xff]
          %v1284 = vld [vmem:[#allocation2 + $0x20] sm:$0xff]
          %v1285 = vld [vmem:[#allocation2 + $0x28] sm:$0xff]
          %v1286 = vld [vmem:[#allocation2 + $0x30] sm:$0xff]
          %v1287 = vld [vmem:[#allocation2 + $0x38] sm:$0xff]
          %v1288 = vld [vmem:[#allocation2 + $0x40] sm:$0xff]
          %v1289 = vld [vmem:[#allocation2 + $0x48] sm:$0xff]
          %v1290 = vld [vmem:[#allocation2 + $0x50] sm:$0xff]
          %v1291 = vld [vmem:[#allocation2 + $0x58] sm:$0xff]
          %v1292 = vld [vmem:[#allocation2 + $0x60] sm:$0xff]
          %v1293 = vld [vmem:[#allocation2 + $0x68] sm:$0xff]
          %v1294 = vld [vmem:[#allocation2 + $0x70] sm:$0xff]
          %v1295 = vld [vmem:[#allocation2 + $0x78] sm:$0xff]
          %v1296 = vld [vmem:[#allocation2 + $0x80] sm:$0xff]
          %v1297 = vld [vmem:[#allocation2 + $0x88] sm:$0xff]
          %v1298 = vld [vmem:[#allocation2 + $0x90] sm:$0xff]
          %v1299 = vld [vmem:[#allocation2 + $0x98] sm:$0xff]
          %v1300 = vld [vmem:[#allocation2 + $0xa0] sm:$0xff]
          %v1301 = vld [vmem:[#allocation2 + $0xa8] sm:$0xff]
          %v1302 = vld [vmem:[#allocation2 + $0xb0] sm:$0xff]
          %v1303 = vld [vmem:[#allocation2 + $0xb8] sm:$0xff]
          %v1304 = vld [vmem:[#allocation2 + $0xc0] sm:$0xff]
          %v1305 = vld [vmem:[#allocation2 + $0xc8] sm:$0xff]
          %v1306 = vld [vmem:[#allocation2 + $0xd0] sm:$0xff]
          %v1307 = vld [vmem:[#allocation2 + $0xd8] sm:$0xff]
          %v1308 = vld [vmem:[#allocation2 + $0xe0] sm:$0xff]
          %v1309 = vld [vmem:[#allocation2 + $0xe8] sm:$0xff]
          %v1310 = vld [vmem:[#allocation2 + $0xf0] sm:$0xff]
          %v1311 = vld [vmem:[#allocation2 + $0xf8] sm:$0xff]
          %v1312 = vld [vmem:[%s4] sm:$0x1]
          %v1314 = vlaneseq
          %v1315 = vshrl.u32 %v1314, 7
          %v1316 = vsub.s32 0, %v1315
          %v1317 = vrot.slane %v1312, %v1316
          %v1319 = vadd.f32 %v1280, %v1317
          %v1320 = vadd.f32 %v1281, %v1317
          %v1321 = vadd.f32 %v1282, %v1317
          %v1322 = vadd.f32 %v1283, %v1317
          %v1323 = vadd.f32 %v1284, %v1317
          %v1324 = vadd.f32 %v1285, %v1317
          %v1325 = vadd.f32 %v1286, %v1317
          %v1326 = vadd.f32 %v1287, %v1317
          %v1327 = vadd.f32 %v1288, %v1317
          %v1328 = vadd.f32 %v1289, %v1317
          %v1329 = vadd.f32 %v1290, %v1317
          %v1330 = vadd.f32 %v1291, %v1317
          %v1331 = vadd.f32 %v1292, %v1317
          %v1332 = vadd.f32 %v1293, %v1317
          %v1333 = vadd.f32 %v1294, %v1317
          %v1334 = vadd.f32 %v1295, %v1317
          %v1335 = vadd.f32 %v1296, %v1317
          %v1336 = vadd.f32 %v1297, %v1317
          %v1337 = vadd.f32 %v1298, %v1317
          %v1338 = vadd.f32 %v1299, %v1317
          %v1339 = vadd.f32 %v1300, %v1317
          %v1340 = vadd.f32 %v1301, %v1317
          %v1341 = vadd.f32 %v1302, %v1317
          %v1342 = vadd.f32 %v1303, %v1317
          %v1343 = vadd.f32 %v1304, %v1317
          %v1344 = vadd.f32 %v1305, %v1317
          %v1345 = vadd.f32 %v1306, %v1317
          %v1346 = vadd.f32 %v1307, %v1317
          %v1347 = vadd.f32 %v1308, %v1317
          %v1348 = vadd.f32 %v1309, %v1317
          %v1349 = vadd.f32 %v1310, %v1317
          %v1350 = vadd.f32 %v1311, %v1317
          %v1351 = vadd.f32 %v1319, %v446
          %v1352 = vadd.f32 %v1320, %v447
          %v1353 = vadd.f32 %v1321, %v448
          %v1354 = vadd.f32 %v1322, %v449
          %v1355 = vadd.f32 %v1323, %v450
          %v1356 = vadd.f32 %v1324, %v451
          %v1357 = vadd.f32 %v1325, %v452
          %v1358 = vadd.f32 %v1326, %v453
          %v1359 = vadd.f32 %v1327, %v454
          %v1360 = vadd.f32 %v1328, %v455
          %v1361 = vadd.f32 %v1329, %v456
          %v1362 = vadd.f32 %v1330, %v457
          %v1363 = vadd.f32 %v1331, %v458
          %v1364 = vadd.f32 %v1332, %v459
          %v1365 = vadd.f32 %v1333, %v460
          %v1366 = vadd.f32 %v1334, %v461
          %v1367 = vadd.f32 %v1335, %v462
          %v1368 = vadd.f32 %v1336, %v463
          %v1369 = vadd.f32 %v1337, %v464
          %v1370 = vadd.f32 %v1338, %v465
          %v1371 = vadd.f32 %v1339, %v466
          %v1372 = vadd.f32 %v1340, %v467
          %v1373 = vadd.f32 %v1341, %v468
          %v1374 = vadd.f32 %v1342, %v469
          %v1375 = vadd.f32 %v1343, %v470
          %v1376 = vadd.f32 %v1344, %v471
          %v1377 = vadd.f32 %v1345, %v472
          %v1378 = vadd.f32 %v1346, %v473
          %v1379 = vadd.f32 %v1347, %v474
          %v1380 = vadd.f32 %v1348, %v475
          %v1381 = vadd.f32 %v1349, %v476
          %v1382 = vadd.f32 %v1350, %v477
          %1383 = vadd.xlane.f32.xlu0 %v1351
          %v1384 = vpop.xlane.xlu0 %1383
          %1385 = vadd.xlane.f32.xlu0 %v1352
          %v1386 = vpop.xlane.xlu0 %1385
          %1387 = vadd.xlane.f32.xlu0 %v1353
          %v1388 = vpop.xlane.xlu0 %1387
          %1389 = vadd.xlane.f32.xlu0 %v1354
          %v1390 = vpop.xlane.xlu0 %1389
          %1391 = vadd.xlane.f32.xlu0 %v1355
          %v1392 = vpop.xlane.xlu0 %1391
          %1393 = vadd.xlane.f32.xlu0 %v1356
          %v1394 = vpop.xlane.xlu0 %1393
          %1395 = vadd.xlane.f32.xlu0 %v1357
          %v1396 = vpop.xlane.xlu0 %1395
          %1397 = vadd.xlane.f32.xlu0 %v1358
          %v1398 = vpop.xlane.xlu0 %1397
          %1399 = vadd.xlane.f32.xlu0 %v1359
          %v1400 = vpop.xlane.xlu0 %1399
          %1401 = vadd.xlane.f32.xlu0 %v1360
          %v1402 = vpop.xlane.xlu0 %1401
          %1403 = vadd.xlane.f32.xlu0 %v1361
          %v1404 = vpop.xlane.xlu0 %1403
          %1405 = vadd.xlane.f32.xlu0 %v1362
          %v1406 = vpop.xlane.xlu0 %1405
          %1407 = vadd.xlane.f32.xlu0 %v1363
          %v1408 = vpop.xlane.xlu0 %1407
          %1409 = vadd.xlane.f32.xlu0 %v1364
          %v1410 = vpop.xlane.xlu0 %1409
          %1411 = vadd.xlane.f32.xlu0 %v1365
          %v1412 = vpop.xlane.xlu0 %1411
          %1413 = vadd.xlane.f32.xlu0 %v1366
          %v1414 = vpop.xlane.xlu0 %1413
          %1415 = vadd.xlane.f32.xlu0 %v1367
          %v1416 = vpop.xlane.xlu0 %1415
          %1417 = vadd.xlane.f32.xlu0 %v1368
          %v1418 = vpop.xlane.xlu0 %1417
          %1419 = vadd.xlane.f32.xlu0 %v1369
          %v1420 = vpop.xlane.xlu0 %1419
          %1421 = vadd.xlane.f32.xlu0 %v1370
          %v1422 = vpop.xlane.xlu0 %1421
          %1423 = vadd.xlane.f32.xlu0 %v1371
          %v1424 = vpop.xlane.xlu0 %1423
          %1425 = vadd.xlane.f32.xlu0 %v1372
          %v1426 = vpop.xlane.xlu0 %1425
          %1427 = vadd.xlane.f32.xlu0 %v1373
          %v1428 = vpop.xlane.xlu0 %1427
          %1429 = vadd.xlane.f32.xlu0 %v1374
          %v1430 = vpop.xlane.xlu0 %1429
          %1431 = vadd.xlane.f32.xlu0 %v1375
          %v1432 = vpop.xlane.xlu0 %1431
          %1433 = vadd.xlane.f32.xlu0 %v1376
          %v1434 = vpop.xlane.xlu0 %1433
          %1435 = vadd.xlane.f32.xlu0 %v1377
          %v1436 = vpop.xlane.xlu0 %1435
          %1437 = vadd.xlane.f32.xlu0 %v1378
          %v1438 = vpop.xlane.xlu0 %1437
          %1439 = vadd.xlane.f32.xlu0 %v1379
          %v1440 = vpop.xlane.xlu0 %1439
          %1441 = vadd.xlane.f32.xlu0 %v1380
          %v1442 = vpop.xlane.xlu0 %1441
          %1443 = vadd.xlane.f32.xlu0 %v1381
          %v1444 = vpop.xlane.xlu0 %1443
          %1445 = vadd.xlane.f32.xlu0 %v1382
          %v1446 = vpop.xlane.xlu0 %1445
          %v1447 = vrcp.pop 128.0
          %v1448 = vmul.f32 %v1384, %v1447
          %v1449 = vmul.f32 %v1386, %v1447
          %v1450 = vmul.f32 %v1388, %v1447
          %v1451 = vmul.f32 %v1390, %v1447
          %v1452 = vmul.f32 %v1392, %v1447
          %v1453 = vmul.f32 %v1394, %v1447
          %v1454 = vmul.f32 %v1396, %v1447
          %v1455 = vmul.f32 %v1398, %v1447
          %v1456 = vmul.f32 %v1400, %v1447
          %v1457 = vmul.f32 %v1402, %v1447
          %v1458 = vmul.f32 %v1404, %v1447
          %v1459 = vmul.f32 %v1406, %v1447
          %v1460 = vmul.f32 %v1408, %v1447
          %v1461 = vmul.f32 %v1410, %v1447
          %v1462 = vmul.f32 %v1412, %v1447
          %v1463 = vmul.f32 %v1414, %v1447
          %v1464 = vmul.f32 %v1416, %v1447
          %v1465 = vmul.f32 %v1418, %v1447
          %v1466 = vmul.f32 %v1420, %v1447
          %v1467 = vmul.f32 %v1422, %v1447
          %v1468 = vmul.f32 %v1424, %v1447
          %v1469 = vmul.f32 %v1426, %v1447
          %v1470 = vmul.f32 %v1428, %v1447
          %v1471 = vmul.f32 %v1430, %v1447
          %v1472 = vmul.f32 %v1432, %v1447
          %v1473 = vmul.f32 %v1434, %v1447
          %v1474 = vmul.f32 %v1436, %v1447
          %v1475 = vmul.f32 %v1438, %v1447
          %v1476 = vmul.f32 %v1440, %v1447
          %v1477 = vmul.f32 %v1442, %v1447
          %v1478 = vmul.f32 %v1444, %v1447
          %v1479 = vmul.f32 %v1446, %v1447
          %v1480 = vsub.f32 %v1351, %v1448
          %v1481 = vsub.f32 %v1352, %v1449
          %v1482 = vsub.f32 %v1353, %v1450
          %v1483 = vsub.f32 %v1354, %v1451
          %v1484 = vsub.f32 %v1355, %v1452
          %v1485 = vsub.f32 %v1356, %v1453
          %v1486 = vsub.f32 %v1357, %v1454
          %v1487 = vsub.f32 %v1358, %v1455
          %v1488 = vsub.f32 %v1359, %v1456
          %v1489 = vsub.f32 %v1360, %v1457
          %v1490 = vsub.f32 %v1361, %v1458
          %v1491 = vsub.f32 %v1362, %v1459
          %v1492 = vsub.f32 %v1363, %v1460
          %v1493 = vsub.f32 %v1364, %v1461
          %v1494 = vsub.f32 %v1365, %v1462
          %v1495 = vsub.f32 %v1366, %v1463
          %v1496 = vsub.f32 %v1367, %v1464
          %v1497 = vsub.f32 %v1368, %v1465
          %v1498 = vsub.f32 %v1369, %v1466
          %v1499 = vsub.f32 %v1370, %v1467
          %v1500 = vsub.f32 %v1371, %v1468
          %v1501 = vsub.f32 %v1372, %v1469
          %v1502 = vsub.f32 %v1373, %v1470
          %v1503 = vsub.f32 %v1374, %v1471
          %v1504 = vsub.f32 %v1375, %v1472
          %v1505 = vsub.f32 %v1376, %v1473
          %v1506 = vsub.f32 %v1377, %v1474
          %v1507 = vsub.f32 %v1378, %v1475
          %v1508 = vsub.f32 %v1379, %v1476
          %v1509 = vsub.f32 %v1380, %v1477
          %v1510 = vsub.f32 %v1381, %v1478
          %v1511 = vsub.f32 %v1382, %v1479
          %v1512 = vmul.f32 %v1480, %v1480
          %v1513 = vmul.f32 %v1481, %v1481
          %v1514 = vmul.f32 %v1482, %v1482
          %v1515 = vmul.f32 %v1483, %v1483
          %v1516 = vmul.f32 %v1484, %v1484
          %v1517 = vmul.f32 %v1485, %v1485
          %v1518 = vmul.f32 %v1486, %v1486
          %v1519 = vmul.f32 %v1487, %v1487
          %v1520 = vmul.f32 %v1488, %v1488
          %v1521 = vmul.f32 %v1489, %v1489
          %v1522 = vmul.f32 %v1490, %v1490
          %v1523 = vmul.f32 %v1491, %v1491
          %v1524 = vmul.f32 %v1492, %v1492
          %v1525 = vmul.f32 %v1493, %v1493
          %v1526 = vmul.f32 %v1494, %v1494
          %v1527 = vmul.f32 %v1495, %v1495
          %v1528 = vmul.f32 %v1496, %v1496
          %v1529 = vmul.f32 %v1497, %v1497
          %v1530 = vmul.f32 %v1498, %v1498
          %v1531 = vmul.f32 %v1499, %v1499
          %v1532 = vmul.f32 %v1500, %v1500
          %v1533 = vmul.f32 %v1501, %v1501
          %v1534 = vmul.f32 %v1502, %v1502
          %v1535 = vmul.f32 %v1503, %v1503
          %v1536 = vmul.f32 %v1504, %v1504
          %v1537 = vmul.f32 %v1505, %v1505
          %v1538 = vmul.f32 %v1506, %v1506
          %v1539 = vmul.f32 %v1507, %v1507
          %v1540 = vmul.f32 %v1508, %v1508
          %v1541 = vmul.f32 %v1509, %v1509
          %v1542 = vmul.f32 %v1510, %v1510
          %v1543 = vmul.f32 %v1511, %v1511
          %1544 = vadd.xlane.f32.xlu0 %v1512
          %v1545 = vpop.xlane.xlu0 %1544
          %1546 = vadd.xlane.f32.xlu0 %v1513
          %v1547 = vpop.xlane.xlu0 %1546
          %1548 = vadd.xlane.f32.xlu0 %v1514
          %v1549 = vpop.xlane.xlu0 %1548
          %1550 = vadd.xlane.f32.xlu0 %v1515
          %v1551 = vpop.xlane.xlu0 %1550
          %1552 = vadd.xlane.f32.xlu0 %v1516
          %v1553 = vpop.xlane.xlu0 %1552
          %1554 = vadd.xlane.f32.xlu0 %v1517
          %v1555 = vpop.xlane.xlu0 %1554
          %1556 = vadd.xlane.f32.xlu0 %v1518
          %v1557 = vpop.xlane.xlu0 %1556
          %1558 = vadd.xlane.f32.xlu0 %v1519
          %v1559 = vpop.xlane.xlu0 %1558
          %1560 = vadd.xlane.f32.xlu0 %v1520
          %v1561 = vpop.xlane.xlu0 %1560
          %1562 = vadd.xlane.f32.xlu0 %v1521
          %v1563 = vpop.xlane.xlu0 %1562
          %1564 = vadd.xlane.f32.xlu0 %v1522
          %v1565 = vpop.xlane.xlu0 %1564
          %1566 = vadd.xlane.f32.xlu0 %v1523
          %v1567 = vpop.xlane.xlu0 %1566
          %1568 = vadd.xlane.f32.xlu0 %v1524
          %v1569 = vpop.xlane.xlu0 %1568
          %1570 = vadd.xlane.f32.xlu0 %v1525
          %v1571 = vpop.xlane.xlu0 %1570
          %1572 = vadd.xlane.f32.xlu0 %v1526
          %v1573 = vpop.xlane.xlu0 %1572
          %1574 = vadd.xlane.f32.xlu0 %v1527
          %v1575 = vpop.xlane.xlu0 %1574
          %1576 = vadd.xlane.f32.xlu0 %v1528
          %v1577 = vpop.xlane.xlu0 %1576
          %1578 = vadd.xlane.f32.xlu0 %v1529
          %v1579 = vpop.xlane.xlu0 %1578
          %1580 = vadd.xlane.f32.xlu0 %v1530
          %v1581 = vpop.xlane.xlu0 %1580
          %1582 = vadd.xlane.f32.xlu0 %v1531
          %v1583 = vpop.xlane.xlu0 %1582
          %1584 = vadd.xlane.f32.xlu0 %v1532
          %v1585 = vpop.xlane.xlu0 %1584
          %1586 = vadd.xlane.f32.xlu0 %v1533
          %v1587 = vpop.xlane.xlu0 %1586
          %1588 = vadd.xlane.f32.xlu0 %v1534
          %v1589 = vpop.xlane.xlu0 %1588
          %1590 = vadd.xlane.f32.xlu0 %v1535
          %v1591 = vpop.xlane.xlu0 %1590
          %1592 = vadd.xlane.f32.xlu0 %v1536
          %v1593 = vpop.xlane.xlu0 %1592
          %1594 = vadd.xlane.f32.xlu0 %v1537
          %v1595 = vpop.xlane.xlu0 %1594
          %1596 = vadd.xlane.f32.xlu0 %v1538
          %v1597 = vpop.xlane.xlu0 %1596
          %1598 = vadd.xlane.f32.xlu0 %v1539
          %v1599 = vpop.xlane.xlu0 %1598
          %1600 = vadd.xlane.f32.xlu0 %v1540
          %v1601 = vpop.xlane.xlu0 %1600
          %1602 = vadd.xlane.f32.xlu0 %v1541
          %v1603 = vpop.xlane.xlu0 %1602
          %1604 = vadd.xlane.f32.xlu0 %v1542
          %v1605 = vpop.xlane.xlu0 %1604
          %1606 = vadd.xlane.f32.xlu0 %v1543
          %v1607 = vpop.xlane.xlu0 %1606
          %v1608 = vrcp.pop 127.0
          %v1609 = vmul.f32 %v1545, %v1608
          %v1610 = vmul.f32 %v1547, %v1608
          %v1611 = vmul.f32 %v1549, %v1608
          %v1612 = vmul.f32 %v1551, %v1608
          %v1613 = vmul.f32 %v1553, %v1608
          %v1614 = vmul.f32 %v1555, %v1608
          %v1615 = vmul.f32 %v1557, %v1608
          %v1616 = vmul.f32 %v1559, %v1608
          %v1617 = vmul.f32 %v1561, %v1608
          %v1618 = vmul.f32 %v1563, %v1608
          %v1619 = vmul.f32 %v1565, %v1608
          %v1620 = vmul.f32 %v1567, %v1608
          %v1621 = vmul.f32 %v1569, %v1608
          %v1622 = vmul.f32 %v1571, %v1608
          %v1623 = vmul.f32 %v1573, %v1608
          %v1624 = vmul.f32 %v1575, %v1608
          %v1625 = vmul.f32 %v1577, %v1608
          %v1626 = vmul.f32 %v1579, %v1608
          %v1627 = vmul.f32 %v1581, %v1608
          %v1628 = vmul.f32 %v1583, %v1608
          %v1629 = vmul.f32 %v1585, %v1608
          %v1630 = vmul.f32 %v1587, %v1608
          %v1631 = vmul.f32 %v1589, %v1608
          %v1632 = vmul.f32 %v1591, %v1608
          %v1633 = vmul.f32 %v1593, %v1608
          %v1634 = vmul.f32 %v1595, %v1608
          %v1635 = vmul.f32 %v1597, %v1608
          %v1636 = vmul.f32 %v1599, %v1608
          %v1637 = vmul.f32 %v1601, %v1608
          %v1638 = vmul.f32 %v1603, %v1608
          %v1639 = vmul.f32 %v1605, %v1608
          %v1640 = vmul.f32 %v1607, %v1608
          %v1641 = vrsqrt.pop %v1609
          %v1642 = vmul.f32 %v1609, %v1641
          %vm1643 = vcmp.eq.f32.partialorder %v1609, inf
          %v1644 = vsel %vm1643, %v1609, %v1642
          %vm1645 = vcmp.eq.f32.partialorder %v1609, 0.0
          %v1646 = vand.u32 %v1609, 2147483648
          %v1647 = vsel %vm1645, %v1646, %v1644
          %v1648 = vrsqrt.pop %v1610
          %v1649 = vmul.f32 %v1610, %v1648
          %vm1650 = vcmp.eq.f32.partialorder %v1610, inf
          %v1651 = vsel %vm1650, %v1610, %v1649
          %vm1652 = vcmp.eq.f32.partialorder %v1610, 0.0
          %v1653 = vand.u32 %v1610, 2147483648
          %v1654 = vsel %vm1652, %v1653, %v1651
          %v1655 = vrsqrt.pop %v1611
          %v1656 = vmul.f32 %v1611, %v1655
          %vm1657 = vcmp.eq.f32.partialorder %v1611, inf
          %v1658 = vsel %vm1657, %v1611, %v1656
          %vm1659 = vcmp.eq.f32.partialorder %v1611, 0.0
          %v1660 = vand.u32 %v1611, 2147483648
          %v1661 = vsel %vm1659, %v1660, %v1658
          %v1662 = vrsqrt.pop %v1612
          %v1663 = vmul.f32 %v1612, %v1662
          %vm1664 = vcmp.eq.f32.partialorder %v1612, inf
          %v1665 = vsel %vm1664, %v1612, %v1663
          %vm1666 = vcmp.eq.f32.partialorder %v1612, 0.0
          %v1667 = vand.u32 %v1612, 2147483648
          %v1668 = vsel %vm1666, %v1667, %v1665
          %v1669 = vrsqrt.pop %v1613
          %v1670 = vmul.f32 %v1613, %v1669
          %vm1671 = vcmp.eq.f32.partialorder %v1613, inf
          %v1672 = vsel %vm1671, %v1613, %v1670
          %vm1673 = vcmp.eq.f32.partialorder %v1613, 0.0
          %v1674 = vand.u32 %v1613, 2147483648
          %v1675 = vsel %vm1673, %v1674, %v1672
          %v1676 = vrsqrt.pop %v1614
          %v1677 = vmul.f32 %v1614, %v1676
          %vm1678 = vcmp.eq.f32.partialorder %v1614, inf
          %v1679 = vsel %vm1678, %v1614, %v1677
          %vm1680 = vcmp.eq.f32.partialorder %v1614, 0.0
          %v1681 = vand.u32 %v1614, 2147483648
          %v1682 = vsel %vm1680, %v1681, %v1679
          %v1683 = vrsqrt.pop %v1615
          %v1684 = vmul.f32 %v1615, %v1683
          %vm1685 = vcmp.eq.f32.partialorder %v1615, inf
          %v1686 = vsel %vm1685, %v1615, %v1684
          %vm1687 = vcmp.eq.f32.partialorder %v1615, 0.0
          %v1688 = vand.u32 %v1615, 2147483648
          %v1689 = vsel %vm1687, %v1688, %v1686
          %v1690 = vrsqrt.pop %v1616
          %v1691 = vmul.f32 %v1616, %v1690
          %vm1692 = vcmp.eq.f32.partialorder %v1616, inf
          %v1693 = vsel %vm1692, %v1616, %v1691
          %vm1694 = vcmp.eq.f32.partialorder %v1616, 0.0
          %v1695 = vand.u32 %v1616, 2147483648
          %v1696 = vsel %vm1694, %v1695, %v1693
          %v1697 = vrsqrt.pop %v1617
          %v1698 = vmul.f32 %v1617, %v1697
          %vm1699 = vcmp.eq.f32.partialorder %v1617, inf
          %v1700 = vsel %vm1699, %v1617, %v1698
          %vm1701 = vcmp.eq.f32.partialorder %v1617, 0.0
          %v1702 = vand.u32 %v1617, 2147483648
          %v1703 = vsel %vm1701, %v1702, %v1700
          %v1704 = vrsqrt.pop %v1618
          %v1705 = vmul.f32 %v1618, %v1704
          %vm1706 = vcmp.eq.f32.partialorder %v1618, inf
          %v1707 = vsel %vm1706, %v1618, %v1705
          %vm1708 = vcmp.eq.f32.partialorder %v1618, 0.0
          %v1709 = vand.u32 %v1618, 2147483648
          %v1710 = vsel %vm1708, %v1709, %v1707
          %v1711 = vrsqrt.pop %v1619
          %v1712 = vmul.f32 %v1619, %v1711
          %vm1713 = vcmp.eq.f32.partialorder %v1619, inf
          %v1714 = vsel %vm1713, %v1619, %v1712
          %vm1715 = vcmp.eq.f32.partialorder %v1619, 0.0
          %v1716 = vand.u32 %v1619, 2147483648
          %v1717 = vsel %vm1715, %v1716, %v1714
          %v1718 = vrsqrt.pop %v1620
          %v1719 = vmul.f32 %v1620, %v1718
          %vm1720 = vcmp.eq.f32.partialorder %v1620, inf
          %v1721 = vsel %vm1720, %v1620, %v1719
          %vm1722 = vcmp.eq.f32.partialorder %v1620, 0.0
          %v1723 = vand.u32 %v1620, 2147483648
          %v1724 = vsel %vm1722, %v1723, %v1721
          %v1725 = vrsqrt.pop %v1621
          %v1726 = vmul.f32 %v1621, %v1725
          %vm1727 = vcmp.eq.f32.partialorder %v1621, inf
          %v1728 = vsel %vm1727, %v1621, %v1726
          %vm1729 = vcmp.eq.f32.partialorder %v1621, 0.0
          %v1730 = vand.u32 %v1621, 2147483648
          %v1731 = vsel %vm1729, %v1730, %v1728
          %v1732 = vrsqrt.pop %v1622
          %v1733 = vmul.f32 %v1622, %v1732
          %vm1734 = vcmp.eq.f32.partialorder %v1622, inf
          %v1735 = vsel %vm1734, %v1622, %v1733
          %vm1736 = vcmp.eq.f32.partialorder %v1622, 0.0
          %v1737 = vand.u32 %v1622, 2147483648
          %v1738 = vsel %vm1736, %v1737, %v1735
          %v1739 = vrsqrt.pop %v1623
          %v1740 = vmul.f32 %v1623, %v1739
          %vm1741 = vcmp.eq.f32.partialorder %v1623, inf
          %v1742 = vsel %vm1741, %v1623, %v1740
          %vm1743 = vcmp.eq.f32.partialorder %v1623, 0.0
          %v1744 = vand.u32 %v1623, 2147483648
          %v1745 = vsel %vm1743, %v1744, %v1742
          %v1746 = vrsqrt.pop %v1624
          %v1747 = vmul.f32 %v1624, %v1746
          %vm1748 = vcmp.eq.f32.partialorder %v1624, inf
          %v1749 = vsel %vm1748, %v1624, %v1747
          %vm1750 = vcmp.eq.f32.partialorder %v1624, 0.0
          %v1751 = vand.u32 %v1624, 2147483648
          %v1752 = vsel %vm1750, %v1751, %v1749
          %v1753 = vrsqrt.pop %v1625
          %v1754 = vmul.f32 %v1625, %v1753
          %vm1755 = vcmp.eq.f32.partialorder %v1625, inf
          %v1756 = vsel %vm1755, %v1625, %v1754
          %vm1757 = vcmp.eq.f32.partialorder %v1625, 0.0
          %v1758 = vand.u32 %v1625, 2147483648
          %v1759 = vsel %vm1757, %v1758, %v1756
          %v1760 = vrsqrt.pop %v1626
          %v1761 = vmul.f32 %v1626, %v1760
          %vm1762 = vcmp.eq.f32.partialorder %v1626, inf
          %v1763 = vsel %vm1762, %v1626, %v1761
          %vm1764 = vcmp.eq.f32.partialorder %v1626, 0.0
          %v1765 = vand.u32 %v1626, 2147483648
          %v1766 = vsel %vm1764, %v1765, %v1763
          %v1767 = vrsqrt.pop %v1627
          %v1768 = vmul.f32 %v1627, %v1767
          %vm1769 = vcmp.eq.f32.partialorder %v1627, inf
          %v1770 = vsel %vm1769, %v1627, %v1768
          %vm1771 = vcmp.eq.f32.partialorder %v1627, 0.0
          %v1772 = vand.u32 %v1627, 2147483648
          %v1773 = vsel %vm1771, %v1772, %v1770
          %v1774 = vrsqrt.pop %v1628
          %v1775 = vmul.f32 %v1628, %v1774
          %vm1776 = vcmp.eq.f32.partialorder %v1628, inf
          %v1777 = vsel %vm1776, %v1628, %v1775
          %vm1778 = vcmp.eq.f32.partialorder %v1628, 0.0
          %v1779 = vand.u32 %v1628, 2147483648
          %v1780 = vsel %vm1778, %v1779, %v1777
          %v1781 = vrsqrt.pop %v1629
          %v1782 = vmul.f32 %v1629, %v1781
          %vm1783 = vcmp.eq.f32.partialorder %v1629, inf
          %v1784 = vsel %vm1783, %v1629, %v1782
          %vm1785 = vcmp.eq.f32.partialorder %v1629, 0.0
          %v1786 = vand.u32 %v1629, 2147483648
          %v1787 = vsel %vm1785, %v1786, %v1784
          %v1788 = vrsqrt.pop %v1630
          %v1789 = vmul.f32 %v1630, %v1788
          %vm1790 = vcmp.eq.f32.partialorder %v1630, inf
          %v1791 = vsel %vm1790, %v1630, %v1789
          %vm1792 = vcmp.eq.f32.partialorder %v1630, 0.0
          %v1793 = vand.u32 %v1630, 2147483648
          %v1794 = vsel %vm1792, %v1793, %v1791
          %v1795 = vrsqrt.pop %v1631
          %v1796 = vmul.f32 %v1631, %v1795
          %vm1797 = vcmp.eq.f32.partialorder %v1631, inf
          %v1798 = vsel %vm1797, %v1631, %v1796
          %vm1799 = vcmp.eq.f32.partialorder %v1631, 0.0
          %v1800 = vand.u32 %v1631, 2147483648
          %v1801 = vsel %vm1799, %v1800, %v1798
          %v1802 = vrsqrt.pop %v1632
          %v1803 = vmul.f32 %v1632, %v1802
          %vm1804 = vcmp.eq.f32.partialorder %v1632, inf
          %v1805 = vsel %vm1804, %v1632, %v1803
          %vm1806 = vcmp.eq.f32.partialorder %v1632, 0.0
          %v1807 = vand.u32 %v1632, 2147483648
          %v1808 = vsel %vm1806, %v1807, %v1805
          %v1809 = vrsqrt.pop %v1633
          %v1810 = vmul.f32 %v1633, %v1809
          %vm1811 = vcmp.eq.f32.partialorder %v1633, inf
          %v1812 = vsel %vm1811, %v1633, %v1810
          %vm1813 = vcmp.eq.f32.partialorder %v1633, 0.0
          %v1814 = vand.u32 %v1633, 2147483648
          %v1815 = vsel %vm1813, %v1814, %v1812
          %v1816 = vrsqrt.pop %v1634
          %v1817 = vmul.f32 %v1634, %v1816
          %vm1818 = vcmp.eq.f32.partialorder %v1634, inf
          %v1819 = vsel %vm1818, %v1634, %v1817
          %vm1820 = vcmp.eq.f32.partialorder %v1634, 0.0
          %v1821 = vand.u32 %v1634, 2147483648
          %v1822 = vsel %vm1820, %v1821, %v1819
          %v1823 = vrsqrt.pop %v1635
          %v1824 = vmul.f32 %v1635, %v1823
          %vm1825 = vcmp.eq.f32.partialorder %v1635, inf
          %v1826 = vsel %vm1825, %v1635, %v1824
          %vm1827 = vcmp.eq.f32.partialorder %v1635, 0.0
          %v1828 = vand.u32 %v1635, 2147483648
          %v1829 = vsel %vm1827, %v1828, %v1826
          %v1830 = vrsqrt.pop %v1636
          %v1831 = vmul.f32 %v1636, %v1830
          %vm1832 = vcmp.eq.f32.partialorder %v1636, inf
          %v1833 = vsel %vm1832, %v1636, %v1831
          %vm1834 = vcmp.eq.f32.partialorder %v1636, 0.0
          %v1835 = vand.u32 %v1636, 2147483648
          %v1836 = vsel %vm1834, %v1835, %v1833
          %v1837 = vrsqrt.pop %v1637
          %v1838 = vmul.f32 %v1637, %v1837
          %vm1839 = vcmp.eq.f32.partialorder %v1637, inf
          %v1840 = vsel %vm1839, %v1637, %v1838
          %vm1841 = vcmp.eq.f32.partialorder %v1637, 0.0
          %v1842 = vand.u32 %v1637, 2147483648
          %v1843 = vsel %vm1841, %v1842, %v1840
          %v1844 = vrsqrt.pop %v1638
          %v1845 = vmul.f32 %v1638, %v1844
          %vm1846 = vcmp.eq.f32.partialorder %v1638, inf
          %v1847 = vsel %vm1846, %v1638, %v1845
          %vm1848 = vcmp.eq.f32.partialorder %v1638, 0.0
          %v1849 = vand.u32 %v1638, 2147483648
          %v1850 = vsel %vm1848, %v1849, %v1847
          %v1851 = vrsqrt.pop %v1639
          %v1852 = vmul.f32 %v1639, %v1851
          %vm1853 = vcmp.eq.f32.partialorder %v1639, inf
          %v1854 = vsel %vm1853, %v1639, %v1852
          %vm1855 = vcmp.eq.f32.partialorder %v1639, 0.0
          %v1856 = vand.u32 %v1639, 2147483648
          %v1857 = vsel %vm1855, %v1856, %v1854
          %v1858 = vrsqrt.pop %v1640
          %v1859 = vmul.f32 %v1640, %v1858
          %vm1860 = vcmp.eq.f32.partialorder %v1640, inf
          %v1861 = vsel %vm1860, %v1640, %v1859
          %vm1862 = vcmp.eq.f32.partialorder %v1640, 0.0
          %v1863 = vand.u32 %v1640, 2147483648
          %v1864 = vsel %vm1862, %v1863, %v1861
          %v1865 = vadd.f32 %v1647, 0.001
          %v1866 = vadd.f32 %v1654, 0.001
          %v1867 = vadd.f32 %v1661, 0.001
          %v1868 = vadd.f32 %v1668, 0.001
          %v1869 = vadd.f32 %v1675, 0.001
          %v1870 = vadd.f32 %v1682, 0.001
          %v1871 = vadd.f32 %v1689, 0.001
          %v1872 = vadd.f32 %v1696, 0.001
          %v1873 = vadd.f32 %v1703, 0.001
          %v1874 = vadd.f32 %v1710, 0.001
          %v1875 = vadd.f32 %v1717, 0.001
          %v1876 = vadd.f32 %v1724, 0.001
          %v1877 = vadd.f32 %v1731, 0.001
          %v1878 = vadd.f32 %v1738, 0.001
          %v1879 = vadd.f32 %v1745, 0.001
          %v1880 = vadd.f32 %v1752, 0.001
          %v1881 = vadd.f32 %v1759, 0.001
          %v1882 = vadd.f32 %v1766, 0.001
          %v1883 = vadd.f32 %v1773, 0.001
          %v1884 = vadd.f32 %v1780, 0.001
          %v1885 = vadd.f32 %v1787, 0.001
          %v1886 = vadd.f32 %v1794, 0.001
          %v1887 = vadd.f32 %v1801, 0.001
          %v1888 = vadd.f32 %v1808, 0.001
          %v1889 = vadd.f32 %v1815, 0.001
          %v1890 = vadd.f32 %v1822, 0.001
          %v1891 = vadd.f32 %v1829, 0.001
          %v1892 = vadd.f32 %v1836, 0.001
          %v1893 = vadd.f32 %v1843, 0.001
          %v1894 = vadd.f32 %v1850, 0.001
          %v1895 = vadd.f32 %v1857, 0.001
          %v1896 = vadd.f32 %v1864, 0.001
          %v1897 = vrcp.pop %v1865
          %v1898 = vrcp.pop %v1866
          %v1899 = vrcp.pop %v1867
          %v1900 = vrcp.pop %v1868
          %v1901 = vrcp.pop %v1869
          %v1902 = vrcp.pop %v1870
          %v1903 = vrcp.pop %v1871
          %v1904 = vrcp.pop %v1872
          %v1905 = vrcp.pop %v1873
          %v1906 = vrcp.pop %v1874
          %v1907 = vrcp.pop %v1875
          %v1908 = vrcp.pop %v1876
          %v1909 = vrcp.pop %v1877
          %v1910 = vrcp.pop %v1878
          %v1911 = vrcp.pop %v1879
          %v1912 = vrcp.pop %v1880
          %v1913 = vrcp.pop %v1881
          %v1914 = vrcp.pop %v1882
          %v1915 = vrcp.pop %v1883
          %v1916 = vrcp.pop %v1884
          %v1917 = vrcp.pop %v1885
          %v1918 = vrcp.pop %v1886
          %v1919 = vrcp.pop %v1887
          %v1920 = vrcp.pop %v1888
          %v1921 = vrcp.pop %v1889
          %v1922 = vrcp.pop %v1890
          %v1923 = vrcp.pop %v1891
          %v1924 = vrcp.pop %v1892
          %v1925 = vrcp.pop %v1893
          %v1926 = vrcp.pop %v1894
          %v1927 = vrcp.pop %v1895
          %v1928 = vrcp.pop %v1896
          %v1929 = vmul.f32 %v1480, %v1897
          %v1930 = vmul.f32 %v1481, %v1898
          %v1931 = vmul.f32 %v1482, %v1899
          %v1932 = vmul.f32 %v1483, %v1900
          %v1933 = vmul.f32 %v1484, %v1901
          %v1934 = vmul.f32 %v1485, %v1902
          %v1935 = vmul.f32 %v1486, %v1903
          %v1936 = vmul.f32 %v1487, %v1904
          %v1937 = vmul.f32 %v1488, %v1905
          %v1938 = vmul.f32 %v1489, %v1906
          %v1939 = vmul.f32 %v1490, %v1907
          %v1940 = vmul.f32 %v1491, %v1908
          %v1941 = vmul.f32 %v1492, %v1909
          %v1942 = vmul.f32 %v1493, %v1910
          %v1943 = vmul.f32 %v1494, %v1911
          %v1944 = vmul.f32 %v1495, %v1912
          %v1945 = vmul.f32 %v1496, %v1913
          %v1946 = vmul.f32 %v1497, %v1914
          %v1947 = vmul.f32 %v1498, %v1915
          %v1948 = vmul.f32 %v1499, %v1916
          %v1949 = vmul.f32 %v1500, %v1917
          %v1950 = vmul.f32 %v1501, %v1918
          %v1951 = vmul.f32 %v1502, %v1919
          %v1952 = vmul.f32 %v1503, %v1920
          %v1953 = vmul.f32 %v1504, %v1921
          %v1954 = vmul.f32 %v1505, %v1922
          %v1955 = vmul.f32 %v1506, %v1923
          %v1956 = vmul.f32 %v1507, %v1924
          %v1957 = vmul.f32 %v1508, %v1925
          %v1958 = vmul.f32 %v1509, %v1926
          %v1959 = vmul.f32 %v1510, %v1927
          %v1960 = vmul.f32 %v1511, %v1928
          %v1961 = vld [vmem:[%s5] sm:$0x1]
          %v1963 = vlaneseq
          %v1964 = vshrl.u32 %v1963, 7
          %v1965 = vsub.s32 0, %v1964
          %v1966 = vrot.slane %v1961, %v1965
          %v1968 = vmul.f32 %v1929, %v1966
          %v1969 = vmul.f32 %v1930, %v1966
          %v1970 = vmul.f32 %v1931, %v1966
          %v1971 = vmul.f32 %v1932, %v1966
          %v1972 = vmul.f32 %v1933, %v1966
          %v1973 = vmul.f32 %v1934, %v1966
          %v1974 = vmul.f32 %v1935, %v1966
          %v1975 = vmul.f32 %v1936, %v1966
          %v1976 = vmul.f32 %v1937, %v1966
          %v1977 = vmul.f32 %v1938, %v1966
          %v1978 = vmul.f32 %v1939, %v1966
          %v1979 = vmul.f32 %v1940, %v1966
          %v1980 = vmul.f32 %v1941, %v1966
          %v1981 = vmul.f32 %v1942, %v1966
          %v1982 = vmul.f32 %v1943, %v1966
          %v1983 = vmul.f32 %v1944, %v1966
          %v1984 = vmul.f32 %v1945, %v1966
          %v1985 = vmul.f32 %v1946, %v1966
          %v1986 = vmul.f32 %v1947, %v1966
          %v1987 = vmul.f32 %v1948, %v1966
          %v1988 = vmul.f32 %v1949, %v1966
          %v1989 = vmul.f32 %v1950, %v1966
          %v1990 = vmul.f32 %v1951, %v1966
          %v1991 = vmul.f32 %v1952, %v1966
          %v1992 = vmul.f32 %v1953, %v1966
          %v1993 = vmul.f32 %v1954, %v1966
          %v1994 = vmul.f32 %v1955, %v1966
          %v1995 = vmul.f32 %v1956, %v1966
          %v1996 = vmul.f32 %v1957, %v1966
          %v1997 = vmul.f32 %v1958, %v1966
          %v1998 = vmul.f32 %v1959, %v1966
          %v1999 = vmul.f32 %v1960, %v1966
          %v2000 = vld [vmem:[%s6] sm:$0x1]
          %v2002 = vlaneseq
          %v2003 = vshrl.u32 %v2002, 7
          %v2004 = vsub.s32 0, %v2003
          %v2005 = vrot.slane %v2000, %v2004
          %v2007 = vadd.f32 %v1968, %v2005
          %v2008 = vadd.f32 %v1969, %v2005
          %v2009 = vadd.f32 %v1970, %v2005
          %v2010 = vadd.f32 %v1971, %v2005
          %v2011 = vadd.f32 %v1972, %v2005
          %v2012 = vadd.f32 %v1973, %v2005
          %v2013 = vadd.f32 %v1974, %v2005
          %v2014 = vadd.f32 %v1975, %v2005
          %v2015 = vadd.f32 %v1976, %v2005
          %v2016 = vadd.f32 %v1977, %v2005
          %v2017 = vadd.f32 %v1978, %v2005
          %v2018 = vadd.f32 %v1979, %v2005
          %v2019 = vadd.f32 %v1980, %v2005
          %v2020 = vadd.f32 %v1981, %v2005
          %v2021 = vadd.f32 %v1982, %v2005
          %v2022 = vadd.f32 %v1983, %v2005
          %v2023 = vadd.f32 %v1984, %v2005
          %v2024 = vadd.f32 %v1985, %v2005
          %v2025 = vadd.f32 %v1986, %v2005
          %v2026 = vadd.f32 %v1987, %v2005
          %v2027 = vadd.f32 %v1988, %v2005
          %v2028 = vadd.f32 %v1989, %v2005
          %v2029 = vadd.f32 %v1990, %v2005
          %v2030 = vadd.f32 %v1991, %v2005
          %v2031 = vadd.f32 %v1992, %v2005
          %v2032 = vadd.f32 %v1993, %v2005
          %v2033 = vadd.f32 %v1994, %v2005
          %v2034 = vadd.f32 %v1995, %v2005
          %v2035 = vadd.f32 %v1996, %v2005
          %v2036 = vadd.f32 %v1997, %v2005
          %v2037 = vadd.f32 %v1998, %v2005
          %v2038 = vadd.f32 %v1999, %v2005
          %2039 = vst [vmem:[%s399] sm:$0xff] %v2007
          %2040 = vst [vmem:[%s399 + $0x8] sm:$0xff] %v2008
          %2041 = vst [vmem:[%s399 + $0x10] sm:$0xff] %v2009
          %2042 = vst [vmem:[%s399 + $0x18] sm:$0xff] %v2010
          %2043 = vst [vmem:[%s399 + $0x20] sm:$0xff] %v2011
          %2044 = vst [vmem:[%s399 + $0x28] sm:$0xff] %v2012
          %2045 = vst [vmem:[%s399 + $0x30] sm:$0xff] %v2013
          %2046 = vst [vmem:[%s399 + $0x38] sm:$0xff] %v2014
          %2047 = vst [vmem:[%s399 + $0x40] sm:$0xff] %v2015
          %2048 = vst [vmem:[%s399 + $0x48] sm:$0xff] %v2016
          %2049 = vst [vmem:[%s399 + $0x50] sm:$0xff] %v2017
          %2050 = vst [vmem:[%s399 + $0x58] sm:$0xff] %v2018
          %2051 = vst [vmem:[%s399 + $0x60] sm:$0xff] %v2019
          %2052 = vst [vmem:[%s399 + $0x68] sm:$0xff] %v2020
          %2053 = vst [vmem:[%s399 + $0x70] sm:$0xff] %v2021
          %2054 = vst [vmem:[%s399 + $0x78] sm:$0xff] %v2022
          %2055 = vst [vmem:[%s399 + $0x80] sm:$0xff] %v2023
          %2056 = vst [vmem:[%s399 + $0x88] sm:$0xff] %v2024
          %2057 = vst [vmem:[%s399 + $0x90] sm:$0xff] %v2025
          %2058 = vst [vmem:[%s399 + $0x98] sm:$0xff] %v2026
          %2059 = vst [vmem:[%s399 + $0xa0] sm:$0xff] %v2027
          %2060 = vst [vmem:[%s399 + $0xa8] sm:$0xff] %v2028
          %2061 = vst [vmem:[%s399 + $0xb0] sm:$0xff] %v2029
          %2062 = vst [vmem:[%s399 + $0xb8] sm:$0xff] %v2030
          %2063 = vst [vmem:[%s399 + $0xc0] sm:$0xff] %v2031
          %2064 = vst [vmem:[%s399 + $0xc8] sm:$0xff] %v2032
          %2065 = vst [vmem:[%s399 + $0xd0] sm:$0xff] %v2033
          %2066 = vst [vmem:[%s399 + $0xd8] sm:$0xff] %v2034
          %2067 = vst [vmem:[%s399 + $0xe0] sm:$0xff] %v2035
          %2068 = vst [vmem:[%s399 + $0xe8] sm:$0xff] %v2036
          %2069 = vst [vmem:[%s399 + $0xf0] sm:$0xff] %v2037
          %2070 = vst [vmem:[%s399 + $0xf8] sm:$0xff] %v2038
        $region68: #{tpu_custom_call.1} parent=47 // pred_fallthru
          _
        %s2071 = sand.u32 %s214, 1
        %s2072 = scalar_lea.sflag [#allocation5], %s2071
        %s2073 = sand.u32 %s214, 1
        %s2074 = smul.addr %s2073, 256
        %s2075 = scalar_lea.vmem [#allocation9], %s2074
        // Predicated region
        $region69: #{tpu_custom_call.1} parent=47 // pred_check
          %p2076 = pneg %p224
        $region70: #{tpu_custom_call.1} parent=47 // pred_check_branch
          %2078 = sbr.rel (%p2076) target = $region72
        $region71: #{tpu_custom_call.1} parent=47 // pred_region
          %s2079 = smul.u32 32, %s31
          %s2081 = ssub.s32 4096, 4096
          %2082 = vsyncadd %s2072, %s2081
          %s2083 = smul.addr %s2079, 128
          %s2084 = scalar_lea.hbm %s7, %s2083
          %s2085 = sshll.u32 %s2075, 4
          %s2086 = int_to_ptr.vmem [resolvable:$true] %s2085
          %2091 = dma.vmem_to_hbm [thread:$0]  %s2086, 4096, %s2084, %s2072, 128, 128, 8
        $region72: #{tpu_custom_call.1} parent=47 // pred_fallthru
          _
      $region48: #{tpu_custom_call.1} parent=5 // pred_fallthru
        _
      %p2092 = scmp.le.s32.totalorder 2, %s22
      // Predicated region
      $region73: #{tpu_custom_call.1} parent=5 // pred_check
        %p2093 = pneg %p2092
      $region74: #{tpu_custom_call.1} parent=5 // pred_check_branch
        %2095 = sbr.rel (%p2093) target = $region76
      $region75: #{tpu_custom_call.1} parent=5 // pred_region
        %s2096 = ssub.s32 %s22, 2
        // Predicated region
        $region77: #{tpu_custom_call.1} parent=75 // pred_check
          %p2097 = pneg %p230
        $region78: #{tpu_custom_call.1} parent=75 // pred_check_branch
          %2099 = sbr.rel (%p2097) target = $region80
        $region79: #{tpu_custom_call.1} parent=75 // pred_region
          %s2100 = sand.u32 %s215, 1
          %s2101 = scalar_lea.sflag [#allocation5], %s2100
          %s2102 = sand.u32 %s215, 1
          %s2103 = smul.addr %s2102, 256
          %s2104 = scalar_lea.vmem [#allocation9], %s2103
          %2105 = dma.done %s2101, 4096
        $region80: #{tpu_custom_call.1} parent=75 // pred_fallthru
          _
      $region76: #{tpu_custom_call.1} parent=5 // pred_fallthru
        _
    $region6: #{tpu_custom_call.1} parent=1 // loop_footer
      %s26 = sadd.s32 1, %s22
    $region7: #{tpu_custom_call.1} parent=1 // loop_footer_branch
      %21 = sbr.rel target = $region3
    $region8: #{tpu_custom_call.1} parent=1 // loop_exit
      _
    %2106 = vsyncpa [#allocation4], 1
    %s2107 = scalar_lea.sflag [#allocation4], 1
    %2108 = vsyncpa %s2107, 1
    %2109 = vsyncpa [#allocation7], 1
    %s2110 = scalar_lea.sflag [#allocation7], 1
    %2111 = vsyncpa %s2110, 1
    %2112 = vsyncpa [#allocation5], 1
    %s2113 = scalar_lea.sflag [#allocation5], 1
    %2114 = vsyncpa %s2113, 1

</llo_original>
